<compile_context>
chip_gen: v6e
topology: v6e:2x2x1
jax: 0.10.0
libtpu: 0.0.40
codegen_flags: <defaults>
</compile_context>

<pallas_src>
import functools

import jax
import jax.numpy as jnp
from jax.experimental import pallas as pl
from jax.experimental.pallas import tpu as pltpu


def _flash_mha_kernel(xq_ref, xkv_ref, wq_ref, wkv_ref, wo_ref, bo_ref, o_ref,
                      q_scr, m_scr, l_scr, acc_scr, *,
                      num_heads, head_dim, d_out, q_tile, kv_tile, scale):
    H, hd = num_heads, head_dim
    Tq, Tk = q_tile, kv_tile
    qi = pl.program_id(1)
    ki = pl.program_id(2)
    n_kv = pl.num_programs(2)
    dt = xq_ref.dtype  # MXU operand dtype: bf16 inputs -> bf16 MXU, f32 accumulation.

    # --- init per (batch, q-tile): project Q once, reset online-softmax state -------------
    @pl.when(ki == 0)
    def _():
        q = jnp.dot(xq_ref[0], wq_ref[...], preferred_element_type=jnp.float32)  # (Tq, d_out)
        q = (q * scale).astype(dt)              # fold 1/sqrt(hd) into Q once
        q_scr[...] = q.reshape(Tq, H, hd).transpose(1, 0, 2)                      # (H, Tq, hd)
        m_scr[...] = jnp.full(m_scr.shape, -jnp.inf, dtype=m_scr.dtype)
        l_scr[...] = jnp.zeros(l_scr.shape, dtype=l_scr.dtype)
        acc_scr[...] = jnp.zeros(acc_scr.shape, dtype=acc_scr.dtype)

    q_start = qi * Tq
    kv_start = ki * Tk

    # --- online-softmax update; skip kv tiles entirely above the causal diagonal ----------
    @pl.when(kv_start <= q_start + (Tq - 1))
    def _():
        kvp = jnp.dot(xkv_ref[0], wkv_ref[...],
                      preferred_element_type=jnp.float32)                         # (Tk, 2*d_out)
        k = kvp[:, :d_out].astype(dt).reshape(Tk, H, hd).transpose(1, 0, 2)       # (H, Tk, hd)
        v = kvp[:, d_out:].astype(dt).reshape(Tk, H, hd).transpose(1, 0, 2)       # (H, Tk, hd)

        # Batched scores over all heads: (H, Tq, Tk), contracting head_dim directly.
        s = jax.lax.dot_general(q_scr[...], k, (((2,), (2,)), ((0,), (0,))),
                                preferred_element_type=jnp.float32)

        # Causal mask on absolute positions, generated in-kernel (no (T,T) HBM input).
        rows = q_start + jax.lax.broadcasted_iota(jnp.int32, (Tq, Tk), 0)
        cols = kv_start + jax.lax.broadcasted_iota(jnp.int32, (Tq, Tk), 1)
        s = jnp.where((cols > rows)[None, :, :], -1e30, s)

        m_prev = m_scr[...]
        m_new = jnp.maximum(m_prev, jnp.max(s, axis=-1, keepdims=True))
        alpha = jnp.exp(m_prev - m_new)
        p = jnp.exp(s - m_new)                                                    # (H, Tq, Tk)
        l_scr[...] = alpha * l_scr[...] + jnp.sum(p, axis=-1, keepdims=True)
        acc_scr[...] = alpha * acc_scr[...] + jax.lax.dot_general(
            p.astype(dt), v, (((2,), (1,)), ((0,), (0,))),
            preferred_element_type=jnp.float32)                                   # (H, Tq, hd)
        m_scr[...] = m_new

    # --- finalize: exact normalization + fused per-head output projection -----------------
    @pl.when(ki == n_kv - 1)
    def _():
        # Exact divide on the small (H, Tq, hd) accumulator (fixes the tolerance failure).
        ctx = (acc_scr[...] / l_scr[...]).astype(dt)
        # Head merge fused into out_proj: wo is pre-reshaped to (H, hd, d_out) host-side.
        out_h = jax.lax.dot_general(ctx, wo_ref[...], (((2,), (1,)), ((0,), (0,))),
                                    preferred_element_type=jnp.float32)           # (H, Tq, d_out)
        out = jnp.sum(out_h, axis=0) + bo_ref[0]                                  # (Tq, d_out)
        o_ref[0] = out.astype(o_ref.dtype)


def prepare_params(wq, wk, wv, wo, bo, *, num_heads):
    """One-time (parameter-build-time) weight fusion / re-layout, outside the per-call path."""
    d_in, d_out = wq.shape
    head_dim = d_out // num_heads
    wkv = jnp.concatenate([wk, wv], axis=1)                # (d_in, 2*d_out), fused K|V
    wo_heads = wo.reshape(num_heads, head_dim, d_out)      # (H, hd, d_out), head-major out_proj
    return wq, wkv, wo_heads, bo


def multi_head_attention(x, wq, wkv, wo_heads, bo, *, num_heads,
                         q_tile=None, kv_tile=None):
    B, T, d_in = x.shape
    d_out = wq.shape[1]
    head_dim = d_out // num_heads

    # Tile sizes: full T for small sequences, 256-aligned flash tiles otherwise
    # (256 matches the v6e/v7x MXU; use 128 on v5e).
    if q_tile is None:
        q_tile = T if T <= 256 else 256
    if kv_tile is None:
        kv_tile = T if T <= 256 else 256
    assert T % q_tile == 0 and T % kv_tile == 0, "T must be divisible by the tile sizes"
    n_q, n_kv = T // q_tile, T // kv_tile

    kernel = functools.partial(
        _flash_mha_kernel, num_heads=num_heads, head_dim=head_dim, d_out=d_out,
        q_tile=q_tile, kv_tile=kv_tile, scale=1.0 / (float(head_dim) ** 0.5))

    return pl.pallas_call(
        kernel,
        out_shape=jax.ShapeDtypeStruct((B, T, d_out), x.dtype),
        grid_spec=pltpu.PrefetchScalarGridSpec(
            num_scalar_prefetch=0,
            grid=(B, n_q, n_kv),
            in_specs=[
                pl.BlockSpec((1, q_tile, d_in), lambda b, qi, ki: (b, qi, 0)),    # x (q rows)
                pl.BlockSpec((1, kv_tile, d_in), lambda b, qi, ki: (b, ki, 0)),   # x (kv rows)
                pl.BlockSpec((d_in, d_out), lambda b, qi, ki: (0, 0)),            # W_q
                pl.BlockSpec((d_in, 2 * d_out), lambda b, qi, ki: (0, 0)),        # fused W_k|W_v
                pl.BlockSpec((num_heads, head_dim, d_out),
                             lambda b, qi, ki: (0, 0, 0)),                        # out_proj W (head-major)
                pl.BlockSpec((1, d_out), lambda b, qi, ki: (0, 0)),               # out_proj bias
            ],
            out_specs=pl.BlockSpec((1, q_tile, d_out), lambda b, qi, ki: (b, qi, 0)),
            scratch_shapes=[
                pltpu.VMEM((num_heads, q_tile, head_dim), x.dtype),    # scaled Q (head-major)
                pltpu.VMEM((num_heads, q_tile, 1), jnp.float32),       # running max m
                pltpu.VMEM((num_heads, q_tile, 1), jnp.float32),       # running denom l
                pltpu.VMEM((num_heads, q_tile, head_dim), jnp.float32) # un-normalized ctx acc
            ]),
        # Batch and q-tile axes are independent -> "parallel" (megacore / v7x dual-TC);
        # the kv axis carries the online-softmax accumulation -> "arbitrary".
        compiler_params=pltpu.CompilerParams(
            dimension_semantics=("parallel", "parallel", "arbitrary")),
    )(x, x, wq, wkv, wo_heads, bo)


def _reference(x, wq, wk, wv, wo, bo, num_heads):
    """Pure-JAX port of the PyTorch module's forward (weights pre-transposed to (in, out))."""
    B, T, d_in = x.shape
    d_out = wq.shape[1]
    hd = d_out // num_heads
    mask = jnp.triu(jnp.ones((T, T), dtype=jnp.float32), k=1)
    q = (x @ wq).reshape(B, T, num_heads, hd).transpose(0, 2, 1, 3)
    k = (x @ wk).reshape(B, T, num_heads, hd).transpose(0, 2, 1, 3)
    v = (x @ wv).reshape(B, T, num_heads, hd).transpose(0, 2, 1, 3)
    scores = jnp.einsum("bhqd,bhkd->bhqk", q, k)
    scores = jnp.where(mask[None, None] > 0, -jnp.inf, scores) / (hd ** 0.5)
    w = jax.nn.softmax(scores, axis=-1)
    ctx = jnp.einsum("bhqk,bhkd->bhqd", w, v).transpose(0, 2, 1, 3).reshape(B, T, d_out)
    return ctx @ wo + bo[0]


if __name__ == "__main__":
    # Small shapes consistent with the module: batch=2, seq=8, d_in=32, d_out=32, heads=4.
    B, T, d_in, d_out, num_heads = 2, 8, 32, 32, 4

    key = jax.random.PRNGKey(0)
    kx, kq, kk, kv, ko, kb = jax.random.split(key, 6)

    x = jax.random.normal(kx, (B, T, d_in), dtype=jnp.float32)
    # "Linear" parameters stored pre-transposed as (in, out); qkv_bias=False.
    wq = jax.random.normal(kq, (d_in, d_out), dtype=jnp.float32) * (1.0 / d_in ** 0.5)
    wk = jax.random.normal(kk, (d_in, d_out), dtype=jnp.float32) * (1.0 / d_in ** 0.5)
    wv = jax.random.normal(kv, (d_in, d_out), dtype=jnp.float32) * (1.0 / d_in ** 0.5)
    wo = jax.random.normal(ko, (d_out, d_out), dtype=jnp.float32) * (1.0 / d_out ** 0.5)
    bo = jax.random.normal(kb, (1, d_out), dtype=jnp.float32) * 0.01

    # One-time weight fusion / re-layout (outside the per-forward path).
    wq_p, wkv_p, wo_h_p, bo_p = prepare_params(wq, wk, wv, wo, bo, num_heads=num_heads)

    out = multi_head_attention(x, wq_p, wkv_p, wo_h_p, bo_p, num_heads=num_heads)
    out = jax.block_until_ready(out)

    ref = _reference(x, wq, wk, wv, wo, bo, num_heads)
    assert out.shape == (B, T, d_out)
    # Softmax normalization is now exact, so a tight tolerance passes.
    assert jnp.allclose(out, ref, atol=1e-3, rtol=1e-3), \
        float(jnp.max(jnp.abs(out - ref)))

    print("KERNEL_OK")
</pallas_src>

<mosaic_0001>
module attributes {stable_mosaic.version = 11 : i64} {
  func.func @_flash_mha_kernel(%arg0: i32, %arg1: i32, %arg2: i32, %arg3: memref<1x8x32xf32, #tpu.memory_space<vmem>>, %arg4: memref<1x8x32xf32, #tpu.memory_space<vmem>>, %arg5: memref<32x32xf32, #tpu.memory_space<vmem>>, %arg6: memref<32x64xf32, #tpu.memory_space<vmem>>, %arg7: memref<4x8x32xf32, #tpu.memory_space<vmem>>, %arg8: memref<1x32xf32, #tpu.memory_space<vmem>>, %arg9: memref<1x8x32xf32, #tpu.memory_space<vmem>>, %arg10: memref<4x8x8xf32, #tpu.memory_space<vmem>>, %arg11: memref<4x8x1xf32, #tpu.memory_space<vmem>>, %arg12: memref<4x8x1xf32, #tpu.memory_space<vmem>>, %arg13: memref<4x8x8xf32, #tpu.memory_space<vmem>>) attributes {dimension_semantics = [#tpu.dimension_semantics<parallel>, #tpu.dimension_semantics<parallel>, #tpu.dimension_semantics<arbitrary>], iteration_bounds = array<i64: 2, 1, 1>, scalar_prefetch = 0 : i64, scratch_operands = 4 : i64, tpu.core_type = #tpu.core_type<tc>, window_params = [{transform_indices = @transform_0, window_bounds = array<i64: 1, 8, 32>}, {transform_indices = @transform_1, window_bounds = array<i64: 1, 8, 32>}, {pipeline_mode = #tpu.pipeline_mode<synchronous>, transform_indices = @transform_2, window_bounds = array<i64: 32, 32>}, {pipeline_mode = #tpu.pipeline_mode<synchronous>, transform_indices = @transform_3, window_bounds = array<i64: 32, 64>}, {pipeline_mode = #tpu.pipeline_mode<synchronous>, transform_indices = @transform_4, window_bounds = array<i64: 4, 8, 32>}, {pipeline_mode = #tpu.pipeline_mode<synchronous>, transform_indices = @transform_5, window_bounds = array<i64: 1, 32>}, {transform_indices = @transform_6, window_bounds = array<i64: 1, 8, 32>}]} {
    %c0_i32 = arith.constant 0 : i32
    %0 = arith.cmpi eq, %arg2, %c0_i32 : i32
    %1 = arith.extui %0 : i1 to i32
    %c0_i32_0 = arith.constant 0 : i32
    %2 = arith.cmpi ne, %1, %c0_i32_0 : i32
    scf.if %2 {
      %c0 = arith.constant 0 : index
      %c0_5 = arith.constant 0 : index
      %c0_6 = arith.constant 0 : index
      %12 = vector.load %arg3[%c0, %c0_5, %c0_6] : memref<1x8x32xf32, #tpu.memory_space<vmem>>, vector<1x8x32xf32>
      %13 = vector.shape_cast %12 : vector<1x8x32xf32> to vector<8x32xf32>
      %c0_7 = arith.constant 0 : index
      %c0_8 = arith.constant 0 : index
      %14 = vector.load %arg5[%c0_7, %c0_8] : memref<32x32xf32, #tpu.memory_space<vmem>>, vector<32x32xf32>
      %cst = arith.constant dense<0.000000e+00> : vector<8x32xf32>
      %15 = tpu.matmul %13, %14, %cst {dimension_numbers = #tpu.dot_dimension_numbers<[1], [0], [0], [1], [0, 0, 1, 1], [], []>} : vector<8x32xf32>, vector<32x32xf32>, vector<8x32xf32> -> vector<8x32xf32>
      %cst_9 = arith.constant 0.353553385 : f32
      %16 = vector.broadcast %cst_9 : f32 to vector<8x32xf32>
      %17 = arith.mulf %15, %16 : vector<8x32xf32>
      %18 = vector.shape_cast %17 : vector<8x32xf32> to vector<8x4x8xf32>
      %19 = tpu.transpose %18, [1, 0, 2] : vector<8x4x8xf32> -> vector<4x8x8xf32>
      %c0_10 = arith.constant 0 : index
      %c0_11 = arith.constant 0 : index
      %c0_12 = arith.constant 0 : index
      %20 = vector.load %arg10[%c0_10, %c0_11, %c0_12] : memref<4x8x8xf32, #tpu.memory_space<vmem>>, vector<4x8x8xf32>
      tpu.vector_store %arg10[%c0_10, %c0_11, %c0_12], %19 {strides = array<i32>} : memref<4x8x8xf32, #tpu.memory_space<vmem>>, vector<4x8x8xf32>,
      %cst_13 = arith.constant 0xFF800000 : f32
      %21 = vector.broadcast %cst_13 : f32 to vector<4x8x1xf32>
      %c0_14 = arith.constant 0 : index
      %c0_15 = arith.constant 0 : index
      %c0_16 = arith.constant 0 : index
      %22 = vector.load %arg11[%c0_14, %c0_15, %c0_16] : memref<4x8x1xf32, #tpu.memory_space<vmem>>, vector<4x8x1xf32>
      tpu.vector_store %arg11[%c0_14, %c0_15, %c0_16], %21 {strides = array<i32>} : memref<4x8x1xf32, #tpu.memory_space<vmem>>, vector<4x8x1xf32>,
      %cst_17 = arith.constant 0.000000e+00 : f32
      %23 = vector.broadcast %cst_17 : f32 to vector<4x8x1xf32>
      %c0_18 = arith.constant 0 : index
      %c0_19 = arith.constant 0 : index
      %c0_20 = arith.constant 0 : index
      %24 = vector.load %arg12[%c0_18, %c0_19, %c0_20] : memref<4x8x1xf32, #tpu.memory_space<vmem>>, vector<4x8x1xf32>
      tpu.vector_store %arg12[%c0_18, %c0_19, %c0_20], %23 {strides = array<i32>} : memref<4x8x1xf32, #tpu.memory_space<vmem>>, vector<4x8x1xf32>,
      %cst_21 = arith.constant 0.000000e+00 : f32
      %25 = vector.broadcast %cst_21 : f32 to vector<4x8x8xf32>
      %c0_22 = arith.constant 0 : index
      %c0_23 = arith.constant 0 : index
      %c0_24 = arith.constant 0 : index
      %26 = vector.load %arg13[%c0_22, %c0_23, %c0_24] : memref<4x8x8xf32, #tpu.memory_space<vmem>>, vector<4x8x8xf32>
      tpu.vector_store %arg13[%c0_22, %c0_23, %c0_24], %25 {strides = array<i32>} : memref<4x8x8xf32, #tpu.memory_space<vmem>>, vector<4x8x8xf32>,
    } else {
    }
    %c8_i32 = arith.constant 8 : i32
    %3 = arith.muli %arg1, %c8_i32 : i32
    %c8_i32_1 = arith.constant 8 : i32
    %4 = arith.muli %arg2, %c8_i32_1 : i32
    %c7_i32 = arith.constant 7 : i32
    %5 = arith.addi %3, %c7_i32 : i32
    %6 = arith.cmpi sle, %4, %5 : i32
    %7 = arith.extui %6 : i1 to i32
    %c0_i32_2 = arith.constant 0 : i32
    %8 = arith.cmpi ne, %7, %c0_i32_2 : i32
    scf.if %8 {
      %c0 = arith.constant 0 : index
      %c0_5 = arith.constant 0 : index
      %c0_6 = arith.constant 0 : index
      %12 = vector.load %arg4[%c0, %c0_5, %c0_6] : memref<1x8x32xf32, #tpu.memory_space<vmem>>, vector<1x8x32xf32>
      %13 = vector.shape_cast %12 : vector<1x8x32xf32> to vector<8x32xf32>
      %c0_7 = arith.constant 0 : index
      %c0_8 = arith.constant 0 : index
      %14 = vector.load %arg6[%c0_7, %c0_8] : memref<32x64xf32, #tpu.memory_space<vmem>>, vector<32x64xf32>
      %cst = arith.constant dense<0.000000e+00> : vector<8x64xf32>
      %15 = tpu.matmul %13, %14, %cst {dimension_numbers = #tpu.dot_dimension_numbers<[1], [0], [0], [1], [0, 0, 1, 1], [], []>} : vector<8x32xf32>, vector<32x64xf32>, vector<8x64xf32> -> vector<8x64xf32>
      %16 = vector.extract_strided_slice %15 {offsets = [0, 0], sizes = [8, 32], strides = [1, 1]} : vector<8x64xf32> to vector<8x32xf32>
      %17 = vector.shape_cast %16 : vector<8x32xf32> to vector<8x4x8xf32>
      %18 = tpu.transpose %17, [1, 0, 2] : vector<8x4x8xf32> -> vector<4x8x8xf32>
      %19 = vector.extract_strided_slice %15 {offsets = [0, 32], sizes = [8, 32], strides = [1, 1]} : vector<8x64xf32> to vector<8x32xf32>
      %20 = vector.shape_cast %19 : vector<8x32xf32> to vector<8x4x8xf32>
      %21 = tpu.transpose %20, [1, 0, 2] : vector<8x4x8xf32> -> vector<4x8x8xf32>
      %c0_9 = arith.constant 0 : index
      %c0_10 = arith.constant 0 : index
      %c0_11 = arith.constant 0 : index
      %22 = vector.load %arg10[%c0_9, %c0_10, %c0_11] : memref<4x8x8xf32, #tpu.memory_space<vmem>>, vector<4x8x8xf32>
      %cst_12 = arith.constant dense<0.000000e+00> : vector<4x8x8xf32>
      %23 = tpu.matmul %22, %18, %cst_12 {dimension_numbers = #tpu.dot_dimension_numbers<[2], [2], [1], [1], [0, 0, 0, 1, 1, 1], [0], [0]>} : vector<4x8x8xf32>, vector<4x8x8xf32>, vector<4x8x8xf32> -> vector<4x8x8xf32>
      %24 = tpu.iota {dimensions = array<i32: 0>} : vector<8x8xi32>
      %25 = vector.broadcast %3 : i32 to vector<8x8xi32>
      %26 = arith.addi %25, %24 : vector<8x8xi32>
      %27 = tpu.iota {dimensions = array<i32: 1>} : vector<8x8xi32>
      %28 = vector.broadcast %4 : i32 to vector<8x8xi32>
      %29 = arith.addi %28, %27 : vector<8x8xi32>
      %30 = arith.cmpi sgt, %29, %26 : vector<8x8xi32>
      %31 = vector.shape_cast %30 : vector<8x8xi1> to vector<1x8x8xi1>
      %cst_13 = arith.constant -1.000000e+30 : f32
      %32 = vector.shape_cast %31 : vector<1x8x8xi1> to vector<1x8x8xi1>
      %33 = vector.broadcast %32 : vector<1x8x8xi1> to vector<4x8x8xi1>
      %34 = vector.broadcast %cst_13 : f32 to vector<4x8x8xf32>
      %35 = arith.select %33, %34, %23 : vector<4x8x8xi1>, vector<4x8x8xf32>
      %c0_14 = arith.constant 0 : index
      %c0_15 = arith.constant 0 : index
      %c0_16 = arith.constant 0 : index
      %36 = vector.load %arg11[%c0_14, %c0_15, %c0_16] : memref<4x8x1xf32, #tpu.memory_space<vmem>>, vector<4x8x1xf32>
      %cst_17 = arith.constant dense<0xFF800000> : vector<4x8xf32>
      %37 = vector.multi_reduction <maximumf>, %35, %cst_17 [2] : vector<4x8x8xf32> to vector<4x8xf32>
      %38 = vector.shape_cast %37 : vector<4x8xf32> to vector<4x8x1xf32>
      %39 = arith.maximumf %36, %38 : vector<4x8x1xf32>
      %40 = arith.subf %36, %39 : vector<4x8x1xf32>
      %41 = math.exp %40 : vector<4x8x1xf32>
      %42 = vector.broadcast %39 : vector<4x8x1xf32> to vector<4x8x8xf32>
      %43 = arith.subf %35, %42 : vector<4x8x8xf32>
      %44 = math.exp %43 : vector<4x8x8xf32>
      %c0_18 = arith.constant 0 : index
      %c0_19 = arith.constant 0 : index
      %c0_20 = arith.constant 0 : index
      %45 = vector.load %arg12[%c0_18, %c0_19, %c0_20] : memref<4x8x1xf32, #tpu.memory_space<vmem>>, vector<4x8x1xf32>
      %46 = arith.mulf %41, %45 : vector<4x8x1xf32>
      %cst_21 = arith.constant dense<0.000000e+00> : vector<4x8xf32>
      %47 = vector.multi_reduction <add>, %44, %cst_21 [2] : vector<4x8x8xf32> to vector<4x8xf32>
      %48 = vector.shape_cast %47 : vector<4x8xf32> to vector<4x8x1xf32>
      %49 = arith.addf %46, %48 : vector<4x8x1xf32>
      %c0_22 = arith.constant 0 : index
      %c0_23 = arith.constant 0 : index
      %c0_24 = arith.constant 0 : index
      %50 = vector.load %arg12[%c0_22, %c0_23, %c0_24] : memref<4x8x1xf32, #tpu.memory_space<vmem>>, vector<4x8x1xf32>
      tpu.vector_store %arg12[%c0_22, %c0_23, %c0_24], %49 {strides = array<i32>} : memref<4x8x1xf32, #tpu.memory_space<vmem>>, vector<4x8x1xf32>,
      %c0_25 = arith.constant 0 : index
      %c0_26 = arith.constant 0 : index
      %c0_27 = arith.constant 0 : index
      %51 = vector.load %arg13[%c0_25, %c0_26, %c0_27] : memref<4x8x8xf32, #tpu.memory_space<vmem>>, vector<4x8x8xf32>
      %52 = vector.broadcast %41 : vector<4x8x1xf32> to vector<4x8x8xf32>
      %53 = arith.mulf %52, %51 : vector<4x8x8xf32>
      %cst_28 = arith.constant dense<0.000000e+00> : vector<4x8x8xf32>
      %54 = tpu.matmul %44, %21, %cst_28 {dimension_numbers = #tpu.dot_dimension_numbers<[2], [1], [1], [2], [0, 0, 0, 1, 1, 2], [0], [0]>} : vector<4x8x8xf32>, vector<4x8x8xf32>, vector<4x8x8xf32> -> vector<4x8x8xf32>
      %55 = arith.addf %53, %54 : vector<4x8x8xf32>
      %c0_29 = arith.constant 0 : index
      %c0_30 = arith.constant 0 : index
      %c0_31 = arith.constant 0 : index
      %56 = vector.load %arg13[%c0_29, %c0_30, %c0_31] : memref<4x8x8xf32, #tpu.memory_space<vmem>>, vector<4x8x8xf32>
      tpu.vector_store %arg13[%c0_29, %c0_30, %c0_31], %55 {strides = array<i32>} : memref<4x8x8xf32, #tpu.memory_space<vmem>>, vector<4x8x8xf32>,
      %c0_32 = arith.constant 0 : index
      %c0_33 = arith.constant 0 : index
      %c0_34 = arith.constant 0 : index
      %57 = vector.load %arg11[%c0_32, %c0_33, %c0_34] : memref<4x8x1xf32, #tpu.memory_space<vmem>>, vector<4x8x1xf32>
      tpu.vector_store %arg11[%c0_32, %c0_33, %c0_34], %39 {strides = array<i32>} : memref<4x8x1xf32, #tpu.memory_space<vmem>>, vector<4x8x1xf32>,
    } else {
    }
    %c0_i32_3 = arith.constant 0 : i32
    %9 = arith.cmpi eq, %arg2, %c0_i32_3 : i32
    %10 = arith.extui %9 : i1 to i32
    %c0_i32_4 = arith.constant 0 : i32
    %11 = arith.cmpi ne, %10, %c0_i32_4 : i32
    scf.if %11 {
      %c0 = arith.constant 0 : index
      %c0_5 = arith.constant 0 : index
      %c0_6 = arith.constant 0 : index
      %12 = vector.load %arg13[%c0, %c0_5, %c0_6] : memref<4x8x8xf32, #tpu.memory_space<vmem>>, vector<4x8x8xf32>
      %c0_7 = arith.constant 0 : index
      %c0_8 = arith.constant 0 : index
      %c0_9 = arith.constant 0 : index
      %13 = vector.load %arg12[%c0_7, %c0_8, %c0_9] : memref<4x8x1xf32, #tpu.memory_space<vmem>>, vector<4x8x1xf32>
      %14 = vector.broadcast %13 : vector<4x8x1xf32> to vector<4x8x8xf32>
      %15 = arith.divf %12, %14 : vector<4x8x8xf32>
      %c0_10 = arith.constant 0 : index
      %c0_11 = arith.constant 0 : index
      %c0_12 = arith.constant 0 : index
      %16 = vector.load %arg7[%c0_10, %c0_11, %c0_12] : memref<4x8x32xf32, #tpu.memory_space<vmem>>, vector<4x8x32xf32>
      %cst = arith.constant dense<0.000000e+00> : vector<4x8x32xf32>
      %17 = tpu.matmul %15, %16, %cst {dimension_numbers = #tpu.dot_dimension_numbers<[2], [1], [1], [2], [0, 0, 0, 1, 1, 2], [0], [0]>} : vector<4x8x8xf32>, vector<4x8x32xf32>, vector<4x8x32xf32> -> vector<4x8x32xf32>
      %cst_13 = arith.constant dense<0.000000e+00> : vector<8x32xf32>
      %18 = vector.multi_reduction <add>, %17, %cst_13 [0] : vector<4x8x32xf32> to vector<8x32xf32>
      %c0_14 = arith.constant 0 : index
      %c0_15 = arith.constant 0 : index
      %19 = vector.load %arg8[%c0_14, %c0_15] : memref<1x32xf32, #tpu.memory_space<vmem>>, vector<1x32xf32>
      %20 = vector.shape_cast %19 : vector<1x32xf32> to vector<32xf32>
      %21 = vector.shape_cast %20 : vector<32xf32> to vector<1x32xf32>
      %22 = vector.broadcast %21 : vector<1x32xf32> to vector<8x32xf32>
      %23 = arith.addf %18, %22 : vector<8x32xf32>
      %c0_16 = arith.constant 0 : index
      %c0_17 = arith.constant 0 : index
      %c0_18 = arith.constant 0 : index
      %24 = vector.load %arg9[%c0_16, %c0_17, %c0_18] : memref<1x8x32xf32, #tpu.memory_space<vmem>>, vector<1x8x32xf32>
      %25 = vector.shape_cast %24 : vector<1x8x32xf32> to vector<8x32xf32>
      %26 = vector.shape_cast %23 : vector<8x32xf32> to vector<1x8x32xf32>
      tpu.vector_store %arg9[%c0_16, %c0_17, %c0_18], %26 {strides = array<i32>} : memref<1x8x32xf32, #tpu.memory_space<vmem>>, vector<1x8x32xf32>,
    } else {
    }
    return
  }
  func.func @transform_0(%arg0: i32, %arg1: i32, %arg2: i32) -> (i32, i32, i32) {
    %c0_i32 = arith.constant 0 : i32
    %c0_i32_0 = arith.constant 0 : i32
    return %arg0, %arg1, %c0_i32 : i32, i32, i32
  }
  func.func @transform_1(%arg0: i32, %arg1: i32, %arg2: i32) -> (i32, i32, i32) {
    %c0_i32 = arith.constant 0 : i32
    %c0_i32_0 = arith.constant 0 : i32
    return %arg0, %arg2, %c0_i32 : i32, i32, i32
  }
  func.func @transform_2(%arg0: i32, %arg1: i32, %arg2: i32) -> (i32, i32) {
    %c0_i32 = arith.constant 0 : i32
    %c0_i32_0 = arith.constant 0 : i32
    %c0_i32_1 = arith.constant 0 : i32
    return %c0_i32, %c0_i32_0 : i32, i32
  }
  func.func @transform_3(%arg0: i32, %arg1: i32, %arg2: i32) -> (i32, i32) {
    %c0_i32 = arith.constant 0 : i32
    %c0_i32_0 = arith.constant 0 : i32
    %c0_i32_1 = arith.constant 0 : i32
    return %c0_i32, %c0_i32_0 : i32, i32
  }
  func.func @transform_4(%arg0: i32, %arg1: i32, %arg2: i32) -> (i32, i32, i32) {
    %c0_i32 = arith.constant 0 : i32
    %c0_i32_0 = arith.constant 0 : i32
    %c0_i32_1 = arith.constant 0 : i32
    %c0_i32_2 = arith.constant 0 : i32
    return %c0_i32, %c0_i32_0, %c0_i32_1 : i32, i32, i32
  }
  func.func @transform_5(%arg0: i32, %arg1: i32, %arg2: i32) -> (i32, i32) {
    %c0_i32 = arith.constant 0 : i32
    %c0_i32_0 = arith.constant 0 : i32
    %c0_i32_1 = arith.constant 0 : i32
    return %c0_i32, %c0_i32_0 : i32, i32
  }
  func.func @transform_6(%arg0: i32, %arg1: i32, %arg2: i32) -> (i32, i32, i32) {
    %c0_i32 = arith.constant 0 : i32
    %c0_i32_0 = arith.constant 0 : i32
    return %arg0, %arg1, %c0_i32 : i32, i32, i32
  }
}

</mosaic_0001>

<llo_original>
// kernel: tpu_custom_call.1
$region0: #{tpu_custom_call.1}
  #allocation0 [shape = 'u32[]', space=smem, size = 0x4, offset = 0x4, fixed_abs, tag = 'smem constant byte address 0x4 - core index']
  #allocation1 [shape = 'u32[144,128]{1,0:T(1,128)}', space=vmem, size = 0x12000, scoped, tag = 'internal scratch']
  #allocation2 [shape = 'f32[4,8,8]{2,1,0:T(8,128)}', space=vmem, size = 0x4000, scoped, tag = 'scratch operand']
  #allocation3 [shape = 'f32[4,8,1]{2,1,0:T(8,128)}', space=vmem, size = 0x4000, scoped, tag = 'scratch operand']
  #allocation4 [shape = 'f32[4,8,1]{2,1,0:T(8,128)}', space=vmem, size = 0x4000, scoped, tag = 'scratch operand']
  #allocation5 [shape = 'f32[4,8,8]{2,1,0:T(8,128)}', space=vmem, size = 0x4000, scoped, tag = 'scratch operand']
  %s0 = inlined_call_operand.hbm [shape: f32[2,8,32], index: 0, kind: input, shape index: {}]
  %s1 = inlined_call_operand.hbm [shape: f32[2,8,32], index: 1, kind: input, shape index: {}]
  %s2 = inlined_call_operand.hbm [shape: f32[32,32], index: 2, kind: input, shape index: {}]
  %s3 = inlined_call_operand.hbm [shape: f32[32,64], index: 3, kind: input, shape index: {}]
  %s4 = inlined_call_operand.hbm [shape: f32[4,8,32], index: 4, kind: input, shape index: {}]
  %s5 = inlined_call_operand.vmem [shape: f32[1,32], index: 5, kind: input, shape index: {}]
  %s6 = inlined_call_operand.hbm [shape: f32[2,8,32], index: 6, kind: output, shape index: {}]
  %s7 = sld [smem:[#allocation0]]
  $region89: #{tpu_custom_call.1} parent=0
    _
  %s9 = ssub.s32 1, %s7
  %s10 = scalar_select 0, %s9, %s7
  $region1: #{tpu_custom_call.1} parent=0
    #allocation6 [shape = 'u8[8192]{0}', space=vmem, size = 0x2000, scoped, tag = 'input window, operand 0']
    #allocation7 [shape = 's32[2]{0}', space=sflag, size = 0x8, scoped, tag = 'scoped memory for tpu_custom_call.1']
    #allocation8 [shape = 's32[2]{0}', space=sflag, size = 0x8, scoped, tag = 'scoped memory for tpu_custom_call.1']
    #allocation9 [shape = 'u8[8192]{0}', space=vmem, size = 0x2000, scoped, tag = 'input window, operand 1']
    #allocation10 [shape = 's32[2]{0}', space=sflag, size = 0x8, scoped, tag = 'scoped memory for tpu_custom_call.1']
    #allocation11 [shape = 'u8[16384]{0}', space=vmem, size = 0x4000, scoped, tag = 'input window, operand 2, single buffered']
    #allocation12 [shape = 'u8[16384]{0}', space=vmem, size = 0x4000, scoped, tag = 'input window, operand 3, single buffered']
    #allocation13 [shape = 's32[1]{0}', space=sflag, size = 0x4, scoped, tag = 'scoped memory for tpu_custom_call.1']
    #allocation14 [shape = 'u8[16384]{0}', space=vmem, size = 0x4000, scoped, tag = 'input window, operand 4, single buffered']
    #allocation15 [shape = 'u8[8192]{0}', space=vmem, size = 0x2000, scoped, tag = 'output window, operand 0']
    %11 = vsyncpa [#allocation7], 0
    %s12 = scalar_lea.sflag [#allocation7], 1
    %13 = vsyncpa %s12, 0
    %14 = vsyncpa [#allocation10], 0
    %s15 = scalar_lea.sflag [#allocation10], 1
    %16 = vsyncpa %s15, 0
    %17 = vsyncpa [#allocation13], 0
    %18 = vsyncpa [#allocation8], 0
    %s19 = scalar_lea.sflag [#allocation8], 1
    %20 = vsyncpa %s19, 0
    loop: start=0, step=1, limit=4
    $region2: #{tpu_custom_call.1} parent=1 // loop_pre_header
      _
    $region3: #{tpu_custom_call.1} parent=1 // loop_header
      %s22 = sphi 0, %s26
      %p23 = scmp.ge.s32.totalorder %s22, 4
      %s29 = sphi 0, %s48
      %s30 = sphi 0, %s44
      %s31 = sphi 0, %s40
      %s32 = sphi 0, %s29
      %s33 = sphi 0, %s30
      %s34 = sphi 0, %s31
      %s35 = sphi 0, %s32
      %s36 = sphi 0, %s33
      %s37 = sphi 0, %s34
      %s53 = sphi 0, %s55
      %s56 = sphi 0, %s53
      %s57 = sphi 0, %s56
      %s73 = sphi 0, %s57
      %s81 = sphi 0, %s83
      %s84 = sphi 0, %s81
      %s85 = sphi 0, %s84
      %s101 = sphi 0, %s85
      %s105 = sphi 0, %s105
      %s107 = sphi 0, %s105
      %s108 = sphi 0, %s107
      %s122 = sphi 0, %s108
      %s126 = sphi 0, %s126
      %s128 = sphi 0, %s126
      %s129 = sphi 0, %s128
      %s143 = sphi 0, %s129
      %s147 = sphi 0, %s147
      %s149 = sphi 0, %s147
      %s150 = sphi 0, %s149
      %s164 = sphi 0, %s150
      %s168 = sphi 0, %s168
      %s170 = sphi 0, %s168
      %s171 = sphi 0, %s170
      %s185 = sphi 0, %s171
      %s193 = sphi 0, %s195
      %s196 = sphi 0, %s193
      %s197 = sphi 0, %s196
      %s213 = sphi 0, %s197
    $region4: #{tpu_custom_call.1} parent=1 // loop_header_branch
      %25 = sbr.rel (%p23) target = $region8
    $region5: #{tpu_custom_call.1} parent=1 // loop_body
      %s27 = ssub.s32 %s22, 1
      %s28 = ssub.s32 %s22, 2
      %s38 = sadd.s32 1, %s31
      %p39 = scmp.ge.s32.totalorder %s38, 1
      %s40 = scalar_select %p39, 0, %s38
      %s41 = sadd.s32 1, %s30
      %s42 = scalar_select %p39, %s41, %s30
      %p43 = scmp.ge.s32.totalorder %s42, 1
      %s44 = scalar_select %p43, 0, %s42
      %s45 = sadd.s32 1, %s29
      %s46 = scalar_select %p43, %s45, %s29
      %p47 = scmp.ge.s32.totalorder %s46, 2
      %s48 = scalar_select %p47, 0, %s46
      %s49 = ssub.s32 %s29, %s48
      %s50 = ssub.s32 %s30, %s44
      %s51 = sor.u32 %s49, %s50
      %p52 = scmp.eq.s32.totalorder %s51, 0
      %s54 = sadd.s32 %s53, 1
      %s55 = scalar_select %p52, %s53, %s54
      %p58 = pneg %p52
      %p59 = scmp.eq.s32.totalorder %s22, 1
      %p60 = por %p58, %p59
      %p61 = scmp.ne.s32.totalorder %s53, %s56
      %p62 = scmp.eq.s32.totalorder %s22, 0
      %p63 = por %p61, %p62
      %p64 = scmp.ne.s32.totalorder %s53, %s56
      %p65 = scmp.eq.s32.totalorder %s27, 1
      %p66 = por %p64, %p65
      %p67 = scmp.ne.s32.totalorder %s56, %s57
      %p68 = scmp.eq.s32.totalorder %s27, 0
      %p69 = por %p67, %p68
      %p70 = scmp.ne.s32.totalorder %s56, %s57
      %p71 = scmp.eq.s32.totalorder %s28, 1
      %p72 = por %p70, %p71
      %p74 = scmp.ne.s32.totalorder %s57, %s73
      %p75 = scmp.eq.s32.totalorder %s28, 0
      %p76 = por %p74, %p75
      %s77 = ssub.s32 %s29, %s48
      %s78 = ssub.s32 %s31, %s40
      %s79 = sor.u32 %s77, %s78
      %p80 = scmp.eq.s32.totalorder %s79, 0
      %s82 = sadd.s32 %s81, 1
      %s83 = scalar_select %p80, %s81, %s82
      %p86 = pneg %p80
      %p87 = scmp.eq.s32.totalorder %s22, 1
      %p88 = por %p86, %p87
      %p89 = scmp.ne.s32.totalorder %s81, %s84
      %p90 = scmp.eq.s32.totalorder %s22, 0
      %p91 = por %p89, %p90
      %p92 = scmp.ne.s32.totalorder %s81, %s84
      %p93 = scmp.eq.s32.totalorder %s27, 1
      %p94 = por %p92, %p93
      %p95 = scmp.ne.s32.totalorder %s84, %s85
      %p96 = scmp.eq.s32.totalorder %s27, 0
      %p97 = por %p95, %p96
      %p98 = scmp.ne.s32.totalorder %s84, %s85
      %p99 = scmp.eq.s32.totalorder %s28, 1
      %p100 = por %p98, %p99
      %p102 = scmp.ne.s32.totalorder %s85, %s101
      %p103 = scmp.eq.s32.totalorder %s28, 0
      %p104 = por %p102, %p103
      %s106 = sadd.s32 %s105, 1
      %p109 = scmp.eq.s32.totalorder %s22, 1
      %p110 = scmp.ne.s32.totalorder %s105, %s107
      %p111 = scmp.eq.s32.totalorder %s22, 0
      %p112 = por %p110, %p111
      %p113 = scmp.ne.s32.totalorder %s105, %s107
      %p114 = scmp.eq.s32.totalorder %s27, 1
      %p115 = por %p113, %p114
      %p116 = scmp.ne.s32.totalorder %s107, %s108
      %p117 = scmp.eq.s32.totalorder %s27, 0
      %p118 = por %p116, %p117
      %p119 = scmp.ne.s32.totalorder %s107, %s108
      %p120 = scmp.eq.s32.totalorder %s28, 1
      %p121 = por %p119, %p120
      %p123 = scmp.ne.s32.totalorder %s108, %s122
      %p124 = scmp.eq.s32.totalorder %s28, 0
      %p125 = por %p123, %p124
      %s127 = sadd.s32 %s126, 1
      %p130 = scmp.eq.s32.totalorder %s22, 1
      %p131 = scmp.ne.s32.totalorder %s126, %s128
      %p132 = scmp.eq.s32.totalorder %s22, 0
      %p133 = por %p131, %p132
      %p134 = scmp.ne.s32.totalorder %s126, %s128
      %p135 = scmp.eq.s32.totalorder %s27, 1
      %p136 = por %p134, %p135
      %p137 = scmp.ne.s32.totalorder %s128, %s129
      %p138 = scmp.eq.s32.totalorder %s27, 0
      %p139 = por %p137, %p138
      %p140 = scmp.ne.s32.totalorder %s128, %s129
      %p141 = scmp.eq.s32.totalorder %s28, 1
      %p142 = por %p140, %p141
      %p144 = scmp.ne.s32.totalorder %s129, %s143
      %p145 = scmp.eq.s32.totalorder %s28, 0
      %p146 = por %p144, %p145
      %s148 = sadd.s32 %s147, 1
      %p151 = scmp.eq.s32.totalorder %s22, 1
      %p152 = scmp.ne.s32.totalorder %s147, %s149
      %p153 = scmp.eq.s32.totalorder %s22, 0
      %p154 = por %p152, %p153
      %p155 = scmp.ne.s32.totalorder %s147, %s149
      %p156 = scmp.eq.s32.totalorder %s27, 1
      %p157 = por %p155, %p156
      %p158 = scmp.ne.s32.totalorder %s149, %s150
      %p159 = scmp.eq.s32.totalorder %s27, 0
      %p160 = por %p158, %p159
      %p161 = scmp.ne.s32.totalorder %s149, %s150
      %p162 = scmp.eq.s32.totalorder %s28, 1
      %p163 = por %p161, %p162
      %p165 = scmp.ne.s32.totalorder %s150, %s164
      %p166 = scmp.eq.s32.totalorder %s28, 0
      %p167 = por %p165, %p166
      %s169 = sadd.s32 %s168, 1
      %p172 = scmp.eq.s32.totalorder %s22, 1
      %p173 = scmp.ne.s32.totalorder %s168, %s170
      %p174 = scmp.eq.s32.totalorder %s22, 0
      %p175 = por %p173, %p174
      %p176 = scmp.ne.s32.totalorder %s168, %s170
      %p177 = scmp.eq.s32.totalorder %s27, 1
      %p178 = por %p176, %p177
      %p179 = scmp.ne.s32.totalorder %s170, %s171
      %p180 = scmp.eq.s32.totalorder %s27, 0
      %p181 = por %p179, %p180
      %p182 = scmp.ne.s32.totalorder %s170, %s171
      %p183 = scmp.eq.s32.totalorder %s28, 1
      %p184 = por %p182, %p183
      %p186 = scmp.ne.s32.totalorder %s171, %s185
      %p187 = scmp.eq.s32.totalorder %s28, 0
      %p188 = por %p186, %p187
      %s189 = ssub.s32 %s29, %s48
      %s190 = ssub.s32 %s30, %s44
      %s191 = sor.u32 %s189, %s190
      %p192 = scmp.eq.s32.totalorder %s191, 0
      %s194 = sadd.s32 %s193, 1
      %s195 = scalar_select %p192, %s193, %s194
      %p198 = pneg %p192
      %p199 = scmp.eq.s32.totalorder %s22, 1
      %p200 = por %p198, %p199
      %p201 = scmp.ne.s32.totalorder %s193, %s196
      %p202 = scmp.eq.s32.totalorder %s22, 0
      %p203 = por %p201, %p202
      %p204 = scmp.ne.s32.totalorder %s193, %s196
      %p205 = scmp.eq.s32.totalorder %s27, 1
      %p206 = por %p204, %p205
      %p207 = scmp.ne.s32.totalorder %s196, %s197
      %p208 = scmp.eq.s32.totalorder %s27, 0
      %p209 = por %p207, %p208
      %p210 = scmp.ne.s32.totalorder %s196, %s197
      %p211 = scmp.eq.s32.totalorder %s28, 1
      %p212 = por %p210, %p211
      %p214 = scmp.ne.s32.totalorder %s197, %s213
      %p215 = scmp.eq.s32.totalorder %s28, 0
      %p216 = por %p214, %p215
      %p217 = scmp.le.s32.totalorder 1, %s22
      %p218 = scmp.lt.s32.totalorder %s22, 3
      %p219 = pnand %p217, %p218
      %p220 = pneg %p219
      // Predicated region
      $region9: #{tpu_custom_call.1} parent=5 // pred_check
        _
      $region10: #{tpu_custom_call.1} parent=5 // pred_check_branch
        %222 = sbr.rel (%p219) target = $region12
      $region11: #{tpu_custom_call.1} parent=5 // pred_region
        %s223 = ssub.s32 %s22, 1
        // Predicated region
        $region13: #{tpu_custom_call.1} parent=11 // pred_check
          %p224 = pneg %p118
        $region14: #{tpu_custom_call.1} parent=11 // pred_check_branch
          %226 = sbr.rel (%p224) target = $region16
        $region15: #{tpu_custom_call.1} parent=11 // pred_region
          %s228 = ssub.s32 512, 512
          %229 = vsyncadd [#allocation10], %s228
          %s230 = sshll.u32 [#allocation11], 4
          %s231 = int_to_ptr.vmem [resolvable:$true] %s230
          %236 = dma.hbm_to_vmem [thread:$0]  %s2, 512, %s231, [#allocation10], 128, 128, 8
        $region16: #{tpu_custom_call.1} parent=11 // pred_fallthru
          _
        // Predicated region
        $region17: #{tpu_custom_call.1} parent=11 // pred_check
          %p237 = pneg %p139
        $region18: #{tpu_custom_call.1} parent=11 // pred_check_branch
          %239 = sbr.rel (%p237) target = $region20
        $region19: #{tpu_custom_call.1} parent=11 // pred_region
          %s241 = ssub.s32 512, 512
          %242 = vsyncadd [#allocation13], %s241
          %s243 = sshll.u32 [#allocation12], 4
          %s244 = int_to_ptr.vmem [resolvable:$true] %s243
          %249 = dma.hbm_to_vmem [thread:$0]  %s3, 512, %s244, [#allocation13], 128, 128, 8
        $region20: #{tpu_custom_call.1} parent=11 // pred_fallthru
          _
        // Predicated region
        $region21: #{tpu_custom_call.1} parent=11 // pred_check
          %p250 = pneg %p160
        $region22: #{tpu_custom_call.1} parent=11 // pred_check_branch
          %252 = sbr.rel (%p250) target = $region24
        $region23: #{tpu_custom_call.1} parent=11 // pred_region
          %s254 = ssub.s32 512, 512
          %255 = vsyncadd [#allocation13], %s254
          %s256 = sshll.u32 [#allocation14], 4
          %s257 = int_to_ptr.vmem [resolvable:$true] %s256
          %262 = dma.hbm_to_vmem [thread:$0]  %s4, 512, %s257, [#allocation13], 128, 128, 8
        $region24: #{tpu_custom_call.1} parent=11 // pred_fallthru
          _
        // Predicated region
        $region25: #{tpu_custom_call.1} parent=11 // pred_check
          %p263 = pneg %p181
        $region26: #{tpu_custom_call.1} parent=11 // pred_check_branch
          %265 = sbr.rel (%p263) target = $region28
        $region27: #{tpu_custom_call.1} parent=11 // pred_region
          _
        $region28: #{tpu_custom_call.1} parent=11 // pred_fallthru
          _
      $region12: #{tpu_custom_call.1} parent=5 // pred_fallthru
        _
      %p266 = scmp.lt.s32.totalorder %s22, 2
      // Predicated region
      $region29: #{tpu_custom_call.1} parent=5 // pred_check
        %p267 = pneg %p266
      $region30: #{tpu_custom_call.1} parent=5 // pred_check_branch
        %269 = sbr.rel (%p267) target = $region32
      $region31: #{tpu_custom_call.1} parent=5 // pred_region
        // Predicated region
        $region33: #{tpu_custom_call.1} parent=31 // pred_check
          %p270 = pneg %p63
        $region34: #{tpu_custom_call.1} parent=31 // pred_check_branch
          %272 = sbr.rel (%p270) target = $region36
        $region35: #{tpu_custom_call.1} parent=31 // pred_region
          %s273 = sand.u32 %s53, 1
          %s274 = scalar_lea.sflag [#allocation7], %s273
          %s275 = sand.u32 %s53, 1
          %s276 = smul.addr %s275, 8
          %s277 = scalar_lea.vmem [#allocation6], %s276
          %s279 = ssub.s32 128, 128
          %280 = vsyncadd %s274, %s279
          %s281 = sadd.s32 %s30, %s29
          %s282 = smul.addr %s281, 128
          %s283 = scalar_lea.hbm %s0, %s282
          %s285 = sshll.u32 %s277, 4
          %s286 = int_to_ptr.vmem [resolvable:$true] %s285
          %288 = dma.hbm_to_vmem [thread:$0]  %s283, 128, %s286, %s274
        $region36: #{tpu_custom_call.1} parent=31 // pred_fallthru
          _
        // Predicated region
        $region37: #{tpu_custom_call.1} parent=31 // pred_check
          %p289 = pneg %p91
        $region38: #{tpu_custom_call.1} parent=31 // pred_check_branch
          %291 = sbr.rel (%p289) target = $region40
        $region39: #{tpu_custom_call.1} parent=31 // pred_region
          %s292 = sand.u32 %s22, 1
          %s293 = scalar_lea.sflag [#allocation10], %s292
          %s294 = sand.u32 %s81, 1
          %s295 = smul.addr %s294, 8
          %s296 = scalar_lea.vmem [#allocation9], %s295
          %s298 = ssub.s32 128, 128
          %299 = vsyncadd %s293, %s298
          %s300 = sadd.s32 %s31, %s29
          %s301 = smul.addr %s300, 128
          %s302 = scalar_lea.hbm %s1, %s301
          %s304 = sshll.u32 %s296, 4
          %s305 = int_to_ptr.vmem [resolvable:$true] %s304
          %307 = dma.hbm_to_vmem [thread:$0]  %s302, 128, %s305, %s293
        $region40: #{tpu_custom_call.1} parent=31 // pred_fallthru
          _
      $region32: #{tpu_custom_call.1} parent=5 // pred_fallthru
        _
      %p308 = scmp.le.s32.totalorder 1, %s22
      %p309 = scmp.lt.s32.totalorder %s22, 3
      %p310 = pnand %p308, %p309
      %p311 = pneg %p310
      // Predicated region
      $region41: #{tpu_custom_call.1} parent=5 // pred_check
        _
      $region42: #{tpu_custom_call.1} parent=5 // pred_check_branch
        %313 = sbr.rel (%p310) target = $region44
      $region43: #{tpu_custom_call.1} parent=5 // pred_region
        %s314 = ssub.s32 %s22, 1
        %s315 = sand.u32 %s56, 1
        %s316 = scalar_lea.sflag [#allocation7], %s315
        %s317 = sand.u32 %s56, 1
        %s318 = smul.addr %s317, 8
        %s319 = scalar_lea.vmem [#allocation6], %s318
        // Predicated region
        $region45: #{tpu_custom_call.1} parent=43 // pred_check
          %p320 = pneg %p69
        $region46: #{tpu_custom_call.1} parent=43 // pred_check_branch
          %322 = sbr.rel (%p320) target = $region48
        $region47: #{tpu_custom_call.1} parent=43 // pred_region
          %323 = dma.done %s316, 128
        $region48: #{tpu_custom_call.1} parent=43 // pred_fallthru
          _
        %s324 = sand.u32 %s27, 1
        %s325 = scalar_lea.sflag [#allocation10], %s324
        %s326 = sand.u32 %s84, 1
        %s327 = smul.addr %s326, 8
        %s328 = scalar_lea.vmem [#allocation9], %s327
        // Predicated region
        $region49: #{tpu_custom_call.1} parent=43 // pred_check
          %p329 = pneg %p97
        $region50: #{tpu_custom_call.1} parent=43 // pred_check_branch
          %331 = sbr.rel (%p329) target = $region52
        $region51: #{tpu_custom_call.1} parent=43 // pred_region
          %332 = dma.done %s325, 128
        $region52: #{tpu_custom_call.1} parent=43 // pred_fallthru
          _
        // Predicated region
        $region53: #{tpu_custom_call.1} parent=43 // pred_check
          %p333 = pneg %p118
        $region54: #{tpu_custom_call.1} parent=43 // pred_check_branch
          %335 = sbr.rel (%p333) target = $region56
        $region55: #{tpu_custom_call.1} parent=43 // pred_region
          %336 = dma.done [#allocation10], 512
        $region56: #{tpu_custom_call.1} parent=43 // pred_fallthru
          _
        // Predicated region
        $region57: #{tpu_custom_call.1} parent=43 // pred_check
          %p337 = pneg %p139
        $region58: #{tpu_custom_call.1} parent=43 // pred_check_branch
          %339 = sbr.rel (%p337) target = $region60
        $region59: #{tpu_custom_call.1} parent=43 // pred_region
          %340 = dma.done [#allocation13], 512
        $region60: #{tpu_custom_call.1} parent=43 // pred_fallthru
          _
        // Predicated region
        $region61: #{tpu_custom_call.1} parent=43 // pred_check
          %p341 = pneg %p160
        $region62: #{tpu_custom_call.1} parent=43 // pred_check_branch
          %343 = sbr.rel (%p341) target = $region64
        $region63: #{tpu_custom_call.1} parent=43 // pred_region
          %344 = dma.done [#allocation13], 512
        $region64: #{tpu_custom_call.1} parent=43 // pred_fallthru
          _
        %s345 = sand.u32 %s56, 1
        %s346 = scalar_lea.sflag [#allocation7], %s345
        %s347 = sand.u32 %s56, 1
        %s348 = smul.addr %s347, 8
        %s349 = scalar_lea.vmem [#allocation6], %s348
        %p350 = pneg %p69
        %p351 = pneg %p66
        %s352 = sand.u32 %s27, 1
        %s353 = scalar_lea.sflag [#allocation10], %s352
        %s354 = sand.u32 %s84, 1
        %s355 = smul.addr %s354, 8
        %s356 = scalar_lea.vmem [#allocation9], %s355
        %p357 = pneg %p97
        %p358 = pneg %p94
        %p359 = pneg %p118
        %p360 = pneg %p115
        %p361 = pneg %p139
        %p362 = pneg %p136
        %p363 = pneg %p160
        %p364 = pneg %p157
        %p365 = pneg %p181
        %p366 = pneg %p178
        %p367 = pneg %p209
        %p368 = pneg %p206
        %s369 = sand.u32 %s196, 1
        %s370 = scalar_lea.sflag [#allocation8], %s369
        %s371 = sand.u32 %s196, 1
        %s372 = smul.addr %s371, 8
        %s373 = scalar_lea.vmem [#allocation15], %s372
        %p374 = scmp.eq.s32.totalorder %s34, 0
        // Predicated region
        $region65: #{tpu_custom_call.1} parent=43 // pred_check
          %p375 = pneg %p374
        $region66: #{tpu_custom_call.1} parent=43 // pred_check_branch
          %377 = sbr.rel (%p375) target = $region68
        $region67: #{tpu_custom_call.1} parent=43 // pred_region
          %v378 = vld [vmem:[%s319] sm:$0xff]
          %v379 = vld [vmem:[#allocation11] sm:$0xff]
          %v380 = vld [vmem:[#allocation11 + $0x8] sm:$0xff]
          %v381 = vld [vmem:[#allocation11 + $0x10] sm:$0xff]
          %v382 = vld [vmem:[#allocation11 + $0x18] sm:$0xff]
          %vm383 = vcmask 261120
          %v385 = vsel %vm383, %v378, 0
          %387 = vmatprep.subr.mxu0 0.0
          %388 = vmatpush1.msra.mxu0 0.0
          %389 = vmatprep.subr.mxu0 0.0
          %390 = vmatpush1.msra.mxu0 0.0
          %391 = vmatprep.subr.mxu0 0.0
          %392 = vmatpush1.msra.mxu0 0.0
          %393 = vmatprep.subr.mxu0 0.0
          %394 = vmatpush1.msra.mxu0 0.0
          %395 = vmatprep.subr.mxu0 0.0
          %396 = vmatpush1.msra.mxu0 0.0
          %397 = vmatprep.subr.mxu0 0.0
          %398 = vmatpush1.msra.mxu0 0.0
          %399 = vmatprep.subr.mxu0 0.0
          %400 = vmatpush1.msra.mxu0 0.0
          %401 = vmatprep.subr.mxu0 0.0
          %402 = vmatpush1.msra.mxu0 0.0
          %403 = vmatprep.subr.mxu0 0.0
          %404 = vmatpush1.msra.mxu0 0.0
          %405 = vmatprep.subr.mxu0 0.0
          %406 = vmatpush1.msra.mxu0 0.0
          %407 = vmatprep.subr.mxu0 0.0
          %408 = vmatpush1.msra.mxu0 0.0
          %409 = vmatprep.subr.mxu0 0.0
          %410 = vmatpush1.msra.mxu0 0.0
          %411 = vmatprep.subr.mxu0 0.0
          %412 = vmatpush1.msra.mxu0 %v382
          %413 = vmatprep.subr.mxu0 0.0
          %414 = vmatpush1.msra.mxu0 %v381
          %415 = vmatprep.subr.mxu0 0.0
          %416 = vmatpush1.msra.mxu0 %v380
          %417 = vmatprep.subr.mxu0 0.0
          %418 = vmatpush1.msra.mxu0 %v379
          %419 = vmatprep.subr.mxu0 0.0
          %420 = vmatpush2.msra.mxu0 0.0
          %421 = vmatprep.subr.mxu0 0.0
          %422 = vmatpush2.msra.mxu0 0.0
          %423 = vmatprep.subr.mxu0 0.0
          %424 = vmatpush2.msra.mxu0 0.0
          %425 = vmatprep.subr.mxu0 0.0
          %426 = vmatpush2.msra.mxu0 0.0
          %427 = vmatprep.subr.mxu0 0.0
          %428 = vmatpush2.msra.mxu0 0.0
          %429 = vmatprep.subr.mxu0 0.0
          %430 = vmatpush2.msra.mxu0 0.0
          %431 = vmatprep.subr.mxu0 0.0
          %432 = vmatpush2.msra.mxu0 0.0
          %433 = vmatprep.subr.mxu0 0.0
          %434 = vmatpush2.msra.mxu0 0.0
          %435 = vmatprep.subr.mxu0 0.0
          %436 = vmatpush2.msra.mxu0 0.0
          %437 = vmatprep.subr.mxu0 0.0
          %438 = vmatpush2.msra.mxu0 0.0
          %439 = vmatprep.subr.mxu0 0.0
          %440 = vmatpush2.msra.mxu0 0.0
          %441 = vmatprep.subr.mxu0 0.0
          %442 = vmatpush2.msra.mxu0 0.0
          %443 = vmatprep.subr.mxu0 0.0
          %444 = vmatpush2.msra.mxu0 0.0
          %445 = vmatprep.subr.mxu0 0.0
          %446 = vmatpush2.msra.mxu0 0.0
          %447 = vmatprep.subr.mxu0 0.0
          %448 = vmatpush2.msra.mxu0 0.0
          %449 = vmatprep.subr.mxu0 0.0
          %450 = vmatpush2.msra.mxu0 0.0
          %451 = vmatprep.mubr.f32.mxu0 0.0
          %452 = vmatmul.mubr.f32.gmra.mxu0 %v385
          %v453 = vpop.f32.mrf.mxu0
          %v454 = vadd.f32 0.0, %v453
          %v455 = vpop.f32.mrf.mxu0
          %456 = vdwg.mxu0
          %v457 = vmul.f32 %v454, 0.35355338
          %459 = vrot.lane.b32.xlu0 %v457, 120
          %v460 = vpop.permute.xlu0 %459
          %462 = vrot.lane.b32.xlu0 %v457, 112
          %v463 = vpop.permute.xlu0 %462
          %465 = vrot.lane.b32.xlu0 %v457, 104
          %v466 = vpop.permute.xlu0 %465
          %v468 = vcombine.low %v457, %v463
          %v469 = vcombine.high %v457, %v463
          %v471 = vunpack.c.l.s4 1983009808
          %v472 = vunpack.c.0.s8 %v471
          %v473 = vlaneseq
          %v474 = vshrl.u32 %v473, 7
          %v475 = vsub.s32 %v472, %v474
          %v476 = vrot.slane %v468, %v475
          %v478 = vunpack.c.l.s4 1983009808
          %v479 = vunpack.c.0.s8 %v478
          %v480 = vlaneseq
          %v481 = vshrl.u32 %v480, 7
          %v482 = vsub.s32 %v479, %v481
          %v483 = vrot.slane %v469, %v482
          %v484 = vcombine.low %v460, %v466
          %v485 = vcombine.high %v460, %v466
          %v487 = vunpack.c.l.s4 1983009808
          %v488 = vunpack.c.0.s8 %v487
          %v489 = vlaneseq
          %v490 = vshrl.u32 %v489, 7
          %v491 = vsub.s32 %v488, %v490
          %v492 = vrot.slane %v484, %v491
          %v494 = vunpack.c.l.s4 1983009808
          %v495 = vunpack.c.0.s8 %v494
          %v496 = vlaneseq
          %v497 = vshrl.u32 %v496, 7
          %v498 = vsub.s32 %v495, %v497
          %v499 = vrot.slane %v485, %v498
          %v500 = vcombine.low %v476, %v492
          %v501 = vcombine.high %v476, %v492
          %v503 = vunpack.c.l.s4 1934713408
          %v504 = vunpack.c.0.s8 %v503
          %v505 = vlaneseq
          %v506 = vshrl.u32 %v505, 7
          %v507 = vsub.s32 %v504, %v506
          %v508 = vrot.slane %v500, %v507
          %v510 = vunpack.c.l.s4 1934713408
          %v511 = vunpack.c.0.s8 %v510
          %v512 = vlaneseq
          %v513 = vshrl.u32 %v512, 7
          %v514 = vsub.s32 %v511, %v513
          %v515 = vrot.slane %v501, %v514
          %v516 = vcombine.low %v483, %v499
          %v517 = vcombine.high %v483, %v499
          %v519 = vunpack.c.l.s4 1934713408
          %v520 = vunpack.c.0.s8 %v519
          %v521 = vlaneseq
          %v522 = vshrl.u32 %v521, 7
          %v523 = vsub.s32 %v520, %v522
          %v524 = vrot.slane %v516, %v523
          %v526 = vunpack.c.l.s4 1934713408
          %v527 = vunpack.c.0.s8 %v526
          %v528 = vlaneseq
          %v529 = vshrl.u32 %v528, 7
          %v530 = vsub.s32 %v527, %v529
          %v531 = vrot.slane %v517, %v530
          %v532 = vcombine.high %v508, 0.0
          %v533 = vcombine.high %v515, 0.0
          %v534 = vcombine.high %v524, 0.0
          %v535 = vcombine.high %v531, 0.0
          %v536 = vcombine.low %v508, %v515
          %v538 = vunpack.c.l.s4 1983009808
          %v539 = vunpack.c.0.s8 %v538
          %v540 = vlaneseq
          %v541 = vshrl.u32 %v540, 7
          %v542 = vsub.s32 %v539, %v541
          %v543 = vrot.slane %v536, %v542
          %v544 = vcombine.low %v532, %v533
          %v546 = vunpack.c.l.s4 1983009808
          %v547 = vunpack.c.0.s8 %v546
          %v548 = vlaneseq
          %v549 = vshrl.u32 %v548, 7
          %v550 = vsub.s32 %v547, %v549
          %v551 = vrot.slane %v544, %v550
          %v552 = vcombine.low %v524, %v531
          %v554 = vunpack.c.l.s4 1983009808
          %v555 = vunpack.c.0.s8 %v554
          %v556 = vlaneseq
          %v557 = vshrl.u32 %v556, 7
          %v558 = vsub.s32 %v555, %v557
          %v559 = vrot.slane %v552, %v558
          %v560 = vcombine.low %v534, %v535
          %v562 = vunpack.c.l.s4 1983009808
          %v563 = vunpack.c.0.s8 %v562
          %v564 = vlaneseq
          %v565 = vshrl.u32 %v564, 7
          %v566 = vsub.s32 %v563, %v565
          %v567 = vrot.slane %v560, %v566
          %v568 = vcombine.low %v543, %v551
          %v569 = vcombine.high %v543, %v551
          %v571 = vunpack.c.l.s4 1934713408
          %v572 = vunpack.c.0.s8 %v571
          %v573 = vlaneseq
          %v574 = vshrl.u32 %v573, 7
          %v575 = vsub.s32 %v572, %v574
          %v576 = vrot.slane %v568, %v575
          %v578 = vunpack.c.l.s4 1934713408
          %v579 = vunpack.c.0.s8 %v578
          %v580 = vlaneseq
          %v581 = vshrl.u32 %v580, 7
          %v582 = vsub.s32 %v579, %v581
          %v583 = vrot.slane %v569, %v582
          %v584 = vcombine.low %v559, %v567
          %v585 = vcombine.high %v559, %v567
          %v587 = vunpack.c.l.s4 1934713408
          %v588 = vunpack.c.0.s8 %v587
          %v589 = vlaneseq
          %v590 = vshrl.u32 %v589, 7
          %v591 = vsub.s32 %v588, %v590
          %v592 = vrot.slane %v584, %v591
          %v594 = vunpack.c.l.s4 1934713408
          %v595 = vunpack.c.0.s8 %v594
          %v596 = vlaneseq
          %v597 = vshrl.u32 %v596, 7
          %v598 = vsub.s32 %v595, %v597
          %v599 = vrot.slane %v585, %v598
          %v600 = vcombine.low %v576, %v592
          %v601 = vcombine.high %v576, %v592
          %v602 = vcombine.low %v583, %v599
          %v603 = vcombine.high %v583, %v599
          %vm604 = vcmask 64512
          %605 = vst.msk [vmem:[#allocation2] sm:$0xff] %vm604, %v600
          %606 = vst.msk [vmem:[#allocation2 + $0x8] sm:$0xff] %vm604, %v601
          %607 = vst.msk [vmem:[#allocation2 + $0x10] sm:$0xff] %vm604, %v602
          %608 = vst.msk [vmem:[#allocation2 + $0x18] sm:$0xff] %vm604, %v603
          %vm609 = vcmask 7168
          %610 = vst.msk [vmem:[#allocation3] sm:$0xff] %vm609, -inf
          %611 = vst.msk [vmem:[#allocation3 + $0x8] sm:$0xff] %vm609, -inf
          %612 = vst.msk [vmem:[#allocation3 + $0x10] sm:$0xff] %vm609, -inf
          %613 = vst.msk [vmem:[#allocation3 + $0x18] sm:$0xff] %vm609, -inf
          %614 = vst.msk [vmem:[#allocation4] sm:$0xff] %vm609, 0.0
          %615 = vst.msk [vmem:[#allocation4 + $0x8] sm:$0xff] %vm609, 0.0
          %616 = vst.msk [vmem:[#allocation4 + $0x10] sm:$0xff] %vm609, 0.0
          %617 = vst.msk [vmem:[#allocation4 + $0x18] sm:$0xff] %vm609, 0.0
          %618 = vst.msk [vmem:[#allocation5] sm:$0xff] %vm604, 0.0
          %619 = vst.msk [vmem:[#allocation5 + $0x8] sm:$0xff] %vm604, 0.0
          %620 = vst.msk [vmem:[#allocation5 + $0x10] sm:$0xff] %vm604, 0.0
          %621 = vst.msk [vmem:[#allocation5 + $0x18] sm:$0xff] %vm604, 0.0
        $region68: #{tpu_custom_call.1} parent=43 // pred_fallthru
          _
        %s622 = smul.u32 %s33, 8
        %s623 = smul.u32 %s34, 8
        %s624 = sadd.s32 %s622, 7
        %p625 = scmp.le.s32.totalorder %s623, %s624
        // Predicated region
        $region69: #{tpu_custom_call.1} parent=43 // pred_check
          %p626 = pneg %p625
        $region70: #{tpu_custom_call.1} parent=43 // pred_check_branch
          %628 = sbr.rel (%p626) target = $region72
        $region71: #{tpu_custom_call.1} parent=43 // pred_region
          %v629 = vld [vmem:[%s328] sm:$0xff]
          %v630 = vld [vmem:[#allocation12] sm:$0xff]
          %v631 = vld [vmem:[#allocation12 + $0x8] sm:$0xff]
          %v632 = vld [vmem:[#allocation12 + $0x10] sm:$0xff]
          %v633 = vld [vmem:[#allocation12 + $0x18] sm:$0xff]
          %vm634 = vcmask 261120
          %v636 = vsel %vm634, %v629, 0
          %638 = vmatprep.subr.mxu0 0.0
          %639 = vmatpush1.msra.mxu0 0.0
          %640 = vmatprep.subr.mxu0 0.0
          %641 = vmatpush1.msra.mxu0 0.0
          %642 = vmatprep.subr.mxu0 0.0
          %643 = vmatpush1.msra.mxu0 0.0
          %644 = vmatprep.subr.mxu0 0.0
          %645 = vmatpush1.msra.mxu0 0.0
          %646 = vmatprep.subr.mxu0 0.0
          %647 = vmatpush1.msra.mxu0 0.0
          %648 = vmatprep.subr.mxu0 0.0
          %649 = vmatpush1.msra.mxu0 0.0
          %650 = vmatprep.subr.mxu0 0.0
          %651 = vmatpush1.msra.mxu0 0.0
          %652 = vmatprep.subr.mxu0 0.0
          %653 = vmatpush1.msra.mxu0 0.0
          %654 = vmatprep.subr.mxu0 0.0
          %655 = vmatpush1.msra.mxu0 0.0
          %656 = vmatprep.subr.mxu0 0.0
          %657 = vmatpush1.msra.mxu0 0.0
          %658 = vmatprep.subr.mxu0 0.0
          %659 = vmatpush1.msra.mxu0 0.0
          %660 = vmatprep.subr.mxu0 0.0
          %661 = vmatpush1.msra.mxu0 0.0
          %662 = vmatprep.subr.mxu0 0.0
          %663 = vmatpush1.msra.mxu0 %v633
          %664 = vmatprep.subr.mxu0 0.0
          %665 = vmatpush1.msra.mxu0 %v632
          %666 = vmatprep.subr.mxu0 0.0
          %667 = vmatpush1.msra.mxu0 %v631
          %668 = vmatprep.subr.mxu0 0.0
          %669 = vmatpush1.msra.mxu0 %v630
          %670 = vmatprep.subr.mxu0 0.0
          %671 = vmatpush2.msra.mxu0 0.0
          %672 = vmatprep.subr.mxu0 0.0
          %673 = vmatpush2.msra.mxu0 0.0
          %674 = vmatprep.subr.mxu0 0.0
          %675 = vmatpush2.msra.mxu0 0.0
          %676 = vmatprep.subr.mxu0 0.0
          %677 = vmatpush2.msra.mxu0 0.0
          %678 = vmatprep.subr.mxu0 0.0
          %679 = vmatpush2.msra.mxu0 0.0
          %680 = vmatprep.subr.mxu0 0.0
          %681 = vmatpush2.msra.mxu0 0.0
          %682 = vmatprep.subr.mxu0 0.0
          %683 = vmatpush2.msra.mxu0 0.0
          %684 = vmatprep.subr.mxu0 0.0
          %685 = vmatpush2.msra.mxu0 0.0
          %686 = vmatprep.subr.mxu0 0.0
          %687 = vmatpush2.msra.mxu0 0.0
          %688 = vmatprep.subr.mxu0 0.0
          %689 = vmatpush2.msra.mxu0 0.0
          %690 = vmatprep.subr.mxu0 0.0
          %691 = vmatpush2.msra.mxu0 0.0
          %692 = vmatprep.subr.mxu0 0.0
          %693 = vmatpush2.msra.mxu0 0.0
          %694 = vmatprep.subr.mxu0 0.0
          %695 = vmatpush2.msra.mxu0 0.0
          %696 = vmatprep.subr.mxu0 0.0
          %697 = vmatpush2.msra.mxu0 0.0
          %698 = vmatprep.subr.mxu0 0.0
          %699 = vmatpush2.msra.mxu0 0.0
          %700 = vmatprep.subr.mxu0 0.0
          %701 = vmatpush2.msra.mxu0 0.0
          %702 = vmatprep.mubr.f32.mxu0 0.0
          %703 = vmatmul.mubr.f32.gmra.mxu0 %v636
          %v704 = vpop.f32.mrf.mxu0
          %v705 = vadd.f32 0.0, %v704
          %v706 = vpop.f32.mrf.mxu0
          %707 = vdwg.mxu0
          %709 = vrot.lane.b32.xlu0 %v705, 120
          %v710 = vpop.permute.xlu0 %709
          %712 = vrot.lane.b32.xlu0 %v705, 112
          %v713 = vpop.permute.xlu0 %712
          %715 = vrot.lane.b32.xlu0 %v705, 104
          %v716 = vpop.permute.xlu0 %715
          %v718 = vcombine.low %v705, %v713
          %v719 = vcombine.high %v705, %v713
          %v721 = vunpack.c.l.s4 1983009808
          %v722 = vunpack.c.0.s8 %v721
          %v723 = vlaneseq
          %v724 = vshrl.u32 %v723, 7
          %v725 = vsub.s32 %v722, %v724
          %v726 = vrot.slane %v718, %v725
          %v728 = vunpack.c.l.s4 1983009808
          %v729 = vunpack.c.0.s8 %v728
          %v730 = vlaneseq
          %v731 = vshrl.u32 %v730, 7
          %v732 = vsub.s32 %v729, %v731
          %v733 = vrot.slane %v719, %v732
          %v734 = vcombine.low %v710, %v716
          %v735 = vcombine.high %v710, %v716
          %v737 = vunpack.c.l.s4 1983009808
          %v738 = vunpack.c.0.s8 %v737
          %v739 = vlaneseq
          %v740 = vshrl.u32 %v739, 7
          %v741 = vsub.s32 %v738, %v740
          %v742 = vrot.slane %v734, %v741
          %v744 = vunpack.c.l.s4 1983009808
          %v745 = vunpack.c.0.s8 %v744
          %v746 = vlaneseq
          %v747 = vshrl.u32 %v746, 7
          %v748 = vsub.s32 %v745, %v747
          %v749 = vrot.slane %v735, %v748
          %v750 = vcombine.low %v726, %v742
          %v751 = vcombine.high %v726, %v742
          %v753 = vunpack.c.l.s4 1934713408
          %v754 = vunpack.c.0.s8 %v753
          %v755 = vlaneseq
          %v756 = vshrl.u32 %v755, 7
          %v757 = vsub.s32 %v754, %v756
          %v758 = vrot.slane %v750, %v757
          %v760 = vunpack.c.l.s4 1934713408
          %v761 = vunpack.c.0.s8 %v760
          %v762 = vlaneseq
          %v763 = vshrl.u32 %v762, 7
          %v764 = vsub.s32 %v761, %v763
          %v765 = vrot.slane %v751, %v764
          %v766 = vcombine.low %v733, %v749
          %v767 = vcombine.high %v733, %v749
          %v769 = vunpack.c.l.s4 1934713408
          %v770 = vunpack.c.0.s8 %v769
          %v771 = vlaneseq
          %v772 = vshrl.u32 %v771, 7
          %v773 = vsub.s32 %v770, %v772
          %v774 = vrot.slane %v766, %v773
          %v776 = vunpack.c.l.s4 1934713408
          %v777 = vunpack.c.0.s8 %v776
          %v778 = vlaneseq
          %v779 = vshrl.u32 %v778, 7
          %v780 = vsub.s32 %v777, %v779
          %v781 = vrot.slane %v767, %v780
          %v782 = vcombine.high %v758, 0.0
          %v783 = vcombine.high %v765, 0.0
          %v784 = vcombine.high %v774, 0.0
          %v785 = vcombine.high %v781, 0.0
          %v786 = vcombine.low %v758, %v765
          %v788 = vunpack.c.l.s4 1983009808
          %v789 = vunpack.c.0.s8 %v788
          %v790 = vlaneseq
          %v791 = vshrl.u32 %v790, 7
          %v792 = vsub.s32 %v789, %v791
          %v793 = vrot.slane %v786, %v792
          %v794 = vcombine.low %v782, %v783
          %v796 = vunpack.c.l.s4 1983009808
          %v797 = vunpack.c.0.s8 %v796
          %v798 = vlaneseq
          %v799 = vshrl.u32 %v798, 7
          %v800 = vsub.s32 %v797, %v799
          %v801 = vrot.slane %v794, %v800
          %v802 = vcombine.low %v774, %v781
          %v804 = vunpack.c.l.s4 1983009808
          %v805 = vunpack.c.0.s8 %v804
          %v806 = vlaneseq
          %v807 = vshrl.u32 %v806, 7
          %v808 = vsub.s32 %v805, %v807
          %v809 = vrot.slane %v802, %v808
          %v810 = vcombine.low %v784, %v785
          %v812 = vunpack.c.l.s4 1983009808
          %v813 = vunpack.c.0.s8 %v812
          %v814 = vlaneseq
          %v815 = vshrl.u32 %v814, 7
          %v816 = vsub.s32 %v813, %v815
          %v817 = vrot.slane %v810, %v816
          %v818 = vcombine.low %v793, %v801
          %v819 = vcombine.high %v793, %v801
          %v821 = vunpack.c.l.s4 1934713408
          %v822 = vunpack.c.0.s8 %v821
          %v823 = vlaneseq
          %v824 = vshrl.u32 %v823, 7
          %v825 = vsub.s32 %v822, %v824
          %v826 = vrot.slane %v818, %v825
          %v828 = vunpack.c.l.s4 1934713408
          %v829 = vunpack.c.0.s8 %v828
          %v830 = vlaneseq
          %v831 = vshrl.u32 %v830, 7
          %v832 = vsub.s32 %v829, %v831
          %v833 = vrot.slane %v819, %v832
          %v834 = vcombine.low %v809, %v817
          %v835 = vcombine.high %v809, %v817
          %v837 = vunpack.c.l.s4 1934713408
          %v838 = vunpack.c.0.s8 %v837
          %v839 = vlaneseq
          %v840 = vshrl.u32 %v839, 7
          %v841 = vsub.s32 %v838, %v840
          %v842 = vrot.slane %v834, %v841
          %v844 = vunpack.c.l.s4 1934713408
          %v845 = vunpack.c.0.s8 %v844
          %v846 = vlaneseq
          %v847 = vshrl.u32 %v846, 7
          %v848 = vsub.s32 %v845, %v847
          %v849 = vrot.slane %v835, %v848
          %v850 = vcombine.low %v826, %v842
          %v851 = vcombine.high %v826, %v842
          %v852 = vcombine.low %v833, %v849
          %v853 = vcombine.high %v833, %v849
          %854 = vrot.lane.b32.xlu0 %v705, 96
          %v855 = vpop.permute.xlu0 %854
          %856 = vrot.lane.b32.xlu0 %v710, 96
          %v857 = vpop.permute.xlu0 %856
          %858 = vrot.lane.b32.xlu0 %v713, 96
          %v859 = vpop.permute.xlu0 %858
          %860 = vrot.lane.b32.xlu0 %v716, 96
          %v861 = vpop.permute.xlu0 %860
          %v866 = vcombine.low %v855, %v859
          %v867 = vcombine.high %v855, %v859
          %v869 = vunpack.c.l.s4 1983009808
          %v870 = vunpack.c.0.s8 %v869
          %v871 = vlaneseq
          %v872 = vshrl.u32 %v871, 7
          %v873 = vsub.s32 %v870, %v872
          %v874 = vrot.slane %v866, %v873
          %v876 = vunpack.c.l.s4 1983009808
          %v877 = vunpack.c.0.s8 %v876
          %v878 = vlaneseq
          %v879 = vshrl.u32 %v878, 7
          %v880 = vsub.s32 %v877, %v879
          %v881 = vrot.slane %v867, %v880
          %v882 = vcombine.low %v857, %v861
          %v883 = vcombine.high %v857, %v861
          %v885 = vunpack.c.l.s4 1983009808
          %v886 = vunpack.c.0.s8 %v885
          %v887 = vlaneseq
          %v888 = vshrl.u32 %v887, 7
          %v889 = vsub.s32 %v886, %v888
          %v890 = vrot.slane %v882, %v889
          %v892 = vunpack.c.l.s4 1983009808
          %v893 = vunpack.c.0.s8 %v892
          %v894 = vlaneseq
          %v895 = vshrl.u32 %v894, 7
          %v896 = vsub.s32 %v893, %v895
          %v897 = vrot.slane %v883, %v896
          %v898 = vcombine.low %v874, %v890
          %v899 = vcombine.high %v874, %v890
          %v901 = vunpack.c.l.s4 1934713408
          %v902 = vunpack.c.0.s8 %v901
          %v903 = vlaneseq
          %v904 = vshrl.u32 %v903, 7
          %v905 = vsub.s32 %v902, %v904
          %v906 = vrot.slane %v898, %v905
          %v908 = vunpack.c.l.s4 1934713408
          %v909 = vunpack.c.0.s8 %v908
          %v910 = vlaneseq
          %v911 = vshrl.u32 %v910, 7
          %v912 = vsub.s32 %v909, %v911
          %v913 = vrot.slane %v899, %v912
          %v914 = vcombine.low %v881, %v897
          %v915 = vcombine.high %v881, %v897
          %v917 = vunpack.c.l.s4 1934713408
          %v918 = vunpack.c.0.s8 %v917
          %v919 = vlaneseq
          %v920 = vshrl.u32 %v919, 7
          %v921 = vsub.s32 %v918, %v920
          %v922 = vrot.slane %v914, %v921
          %v924 = vunpack.c.l.s4 1934713408
          %v925 = vunpack.c.0.s8 %v924
          %v926 = vlaneseq
          %v927 = vshrl.u32 %v926, 7
          %v928 = vsub.s32 %v925, %v927
          %v929 = vrot.slane %v915, %v928
          %v930 = vcombine.high %v906, 0.0
          %v931 = vcombine.high %v913, 0.0
          %v932 = vcombine.high %v922, 0.0
          %v933 = vcombine.high %v929, 0.0
          %v934 = vcombine.low %v906, %v913
          %v936 = vunpack.c.l.s4 1983009808
          %v937 = vunpack.c.0.s8 %v936
          %v938 = vlaneseq
          %v939 = vshrl.u32 %v938, 7
          %v940 = vsub.s32 %v937, %v939
          %v941 = vrot.slane %v934, %v940
          %v942 = vcombine.low %v930, %v931
          %v944 = vunpack.c.l.s4 1983009808
          %v945 = vunpack.c.0.s8 %v944
          %v946 = vlaneseq
          %v947 = vshrl.u32 %v946, 7
          %v948 = vsub.s32 %v945, %v947
          %v949 = vrot.slane %v942, %v948
          %v950 = vcombine.low %v922, %v929
          %v952 = vunpack.c.l.s4 1983009808
          %v953 = vunpack.c.0.s8 %v952
          %v954 = vlaneseq
          %v955 = vshrl.u32 %v954, 7
          %v956 = vsub.s32 %v953, %v955
          %v957 = vrot.slane %v950, %v956
          %v958 = vcombine.low %v932, %v933
          %v960 = vunpack.c.l.s4 1983009808
          %v961 = vunpack.c.0.s8 %v960
          %v962 = vlaneseq
          %v963 = vshrl.u32 %v962, 7
          %v964 = vsub.s32 %v961, %v963
          %v965 = vrot.slane %v958, %v964
          %v966 = vcombine.low %v941, %v949
          %v967 = vcombine.high %v941, %v949
          %v969 = vunpack.c.l.s4 1934713408
          %v970 = vunpack.c.0.s8 %v969
          %v971 = vlaneseq
          %v972 = vshrl.u32 %v971, 7
          %v973 = vsub.s32 %v970, %v972
          %v974 = vrot.slane %v966, %v973
          %v976 = vunpack.c.l.s4 1934713408
          %v977 = vunpack.c.0.s8 %v976
          %v978 = vlaneseq
          %v979 = vshrl.u32 %v978, 7
          %v980 = vsub.s32 %v977, %v979
          %v981 = vrot.slane %v967, %v980
          %v982 = vcombine.low %v957, %v965
          %v983 = vcombine.high %v957, %v965
          %v985 = vunpack.c.l.s4 1934713408
          %v986 = vunpack.c.0.s8 %v985
          %v987 = vlaneseq
          %v988 = vshrl.u32 %v987, 7
          %v989 = vsub.s32 %v986, %v988
          %v990 = vrot.slane %v982, %v989
          %v992 = vunpack.c.l.s4 1934713408
          %v993 = vunpack.c.0.s8 %v992
          %v994 = vlaneseq
          %v995 = vshrl.u32 %v994, 7
          %v996 = vsub.s32 %v993, %v995
          %v997 = vrot.slane %v983, %v996
          %v998 = vcombine.low %v974, %v990
          %v999 = vcombine.high %v974, %v990
          %v1000 = vcombine.low %v981, %v997
          %v1001 = vcombine.high %v981, %v997
          %v1002 = vld [vmem:[#allocation2] sm:$0xff]
          %v1003 = vld [vmem:[#allocation2 + $0x8] sm:$0xff]
          %v1004 = vld [vmem:[#allocation2 + $0x10] sm:$0xff]
          %v1005 = vld [vmem:[#allocation2 + $0x18] sm:$0xff]
          %vm1006 = vcmask 64512
          %v1008 = vsel %vm1006, %v1002, 0
          %v1011 = vsel %vm1006, %v850, 0
          %1013 = vmatprep.subr.mxu0 0.0
          %1014 = vmatpush1.xpose.msra.mxu0 0.0
          %1015 = vmatprep.subr.mxu0 0.0
          %1016 = vmatpush1.xpose.msra.mxu0 0.0
          %1017 = vmatprep.subr.mxu0 0.0
          %1018 = vmatpush1.xpose.msra.mxu0 0.0
          %1019 = vmatprep.subr.mxu0 0.0
          %1020 = vmatpush1.xpose.msra.mxu0 0.0
          %1021 = vmatprep.subr.mxu0 0.0
          %1022 = vmatpush1.xpose.msra.mxu0 0.0
          %1023 = vmatprep.subr.mxu0 0.0
          %1024 = vmatpush1.xpose.msra.mxu0 0.0
          %1025 = vmatprep.subr.mxu0 0.0
          %1026 = vmatpush1.xpose.msra.mxu0 0.0
          %1027 = vmatprep.subr.mxu0 0.0
          %1028 = vmatpush1.xpose.msra.mxu0 0.0
          %1029 = vmatprep.subr.mxu0 0.0
          %1030 = vmatpush1.xpose.msra.mxu0 0.0
          %1031 = vmatprep.subr.mxu0 0.0
          %1032 = vmatpush1.xpose.msra.mxu0 0.0
          %1033 = vmatprep.subr.mxu0 0.0
          %1034 = vmatpush1.xpose.msra.mxu0 0.0
          %1035 = vmatprep.subr.mxu0 0.0
          %1036 = vmatpush1.xpose.msra.mxu0 0.0
          %1037 = vmatprep.subr.mxu0 0.0
          %1038 = vmatpush1.xpose.msra.mxu0 0.0
          %1039 = vmatprep.subr.mxu0 0.0
          %1040 = vmatpush1.xpose.msra.mxu0 0.0
          %1041 = vmatprep.subr.mxu0 0.0
          %1042 = vmatpush1.xpose.msra.mxu0 0.0
          %1043 = vmatprep.subr.mxu0 0.0
          %1044 = vmatpush1.xpose.msra.mxu0 %v1011
          %1045 = vmatprep.subr.mxu0 0.0
          %1046 = vmatpush2.xpose.msra.mxu0 0.0
          %1047 = vmatprep.subr.mxu0 0.0
          %1048 = vmatpush2.xpose.msra.mxu0 0.0
          %1049 = vmatprep.subr.mxu0 0.0
          %1050 = vmatpush2.xpose.msra.mxu0 0.0
          %1051 = vmatprep.subr.mxu0 0.0
          %1052 = vmatpush2.xpose.msra.mxu0 0.0
          %1053 = vmatprep.subr.mxu0 0.0
          %1054 = vmatpush2.xpose.msra.mxu0 0.0
          %1055 = vmatprep.subr.mxu0 0.0
          %1056 = vmatpush2.xpose.msra.mxu0 0.0
          %1057 = vmatprep.subr.mxu0 0.0
          %1058 = vmatpush2.xpose.msra.mxu0 0.0
          %1059 = vmatprep.subr.mxu0 0.0
          %1060 = vmatpush2.xpose.msra.mxu0 0.0
          %1061 = vmatprep.subr.mxu0 0.0
          %1062 = vmatpush2.xpose.msra.mxu0 0.0
          %1063 = vmatprep.subr.mxu0 0.0
          %1064 = vmatpush2.xpose.msra.mxu0 0.0
          %1065 = vmatprep.subr.mxu0 0.0
          %1066 = vmatpush2.xpose.msra.mxu0 0.0
          %1067 = vmatprep.subr.mxu0 0.0
          %1068 = vmatpush2.xpose.msra.mxu0 0.0
          %1069 = vmatprep.subr.mxu0 0.0
          %1070 = vmatpush2.xpose.msra.mxu0 0.0
          %1071 = vmatprep.subr.mxu0 0.0
          %1072 = vmatpush2.xpose.msra.mxu0 0.0
          %1073 = vmatprep.subr.mxu0 0.0
          %1074 = vmatpush2.xpose.msra.mxu0 0.0
          %1075 = vmatprep.subr.mxu0 0.0
          %1076 = vmatpush2.xpose.msra.mxu0 0.0
          %1077 = vmatprep.mubr.f32.mxu0 0.0
          %1078 = vmatmul.mubr.f32.gmra.mxu0 %v1008
          %v1079 = vpop.f32.mrf.mxu0
          %v1080 = vadd.f32 0.0, %v1079
          %v1081 = vpop.f32.mrf.mxu0
          %1082 = vdwg.mxu0
          %v1084 = vsel %vm1006, %v1003, 0
          %v1087 = vsel %vm1006, %v851, 0
          %1089 = vmatprep.subr.mxu0 0.0
          %1090 = vmatpush1.xpose.msra.mxu0 0.0
          %1091 = vmatprep.subr.mxu0 0.0
          %1092 = vmatpush1.xpose.msra.mxu0 0.0
          %1093 = vmatprep.subr.mxu0 0.0
          %1094 = vmatpush1.xpose.msra.mxu0 0.0
          %1095 = vmatprep.subr.mxu0 0.0
          %1096 = vmatpush1.xpose.msra.mxu0 0.0
          %1097 = vmatprep.subr.mxu0 0.0
          %1098 = vmatpush1.xpose.msra.mxu0 0.0
          %1099 = vmatprep.subr.mxu0 0.0
          %1100 = vmatpush1.xpose.msra.mxu0 0.0
          %1101 = vmatprep.subr.mxu0 0.0
          %1102 = vmatpush1.xpose.msra.mxu0 0.0
          %1103 = vmatprep.subr.mxu0 0.0
          %1104 = vmatpush1.xpose.msra.mxu0 0.0
          %1105 = vmatprep.subr.mxu0 0.0
          %1106 = vmatpush1.xpose.msra.mxu0 0.0
          %1107 = vmatprep.subr.mxu0 0.0
          %1108 = vmatpush1.xpose.msra.mxu0 0.0
          %1109 = vmatprep.subr.mxu0 0.0
          %1110 = vmatpush1.xpose.msra.mxu0 0.0
          %1111 = vmatprep.subr.mxu0 0.0
          %1112 = vmatpush1.xpose.msra.mxu0 0.0
          %1113 = vmatprep.subr.mxu0 0.0
          %1114 = vmatpush1.xpose.msra.mxu0 0.0
          %1115 = vmatprep.subr.mxu0 0.0
          %1116 = vmatpush1.xpose.msra.mxu0 0.0
          %1117 = vmatprep.subr.mxu0 0.0
          %1118 = vmatpush1.xpose.msra.mxu0 0.0
          %1119 = vmatprep.subr.mxu0 0.0
          %1120 = vmatpush1.xpose.msra.mxu0 %v1087
          %1121 = vmatprep.subr.mxu0 0.0
          %1122 = vmatpush2.xpose.msra.mxu0 0.0
          %1123 = vmatprep.subr.mxu0 0.0
          %1124 = vmatpush2.xpose.msra.mxu0 0.0
          %1125 = vmatprep.subr.mxu0 0.0
          %1126 = vmatpush2.xpose.msra.mxu0 0.0
          %1127 = vmatprep.subr.mxu0 0.0
          %1128 = vmatpush2.xpose.msra.mxu0 0.0
          %1129 = vmatprep.subr.mxu0 0.0
          %1130 = vmatpush2.xpose.msra.mxu0 0.0
          %1131 = vmatprep.subr.mxu0 0.0
          %1132 = vmatpush2.xpose.msra.mxu0 0.0
          %1133 = vmatprep.subr.mxu0 0.0
          %1134 = vmatpush2.xpose.msra.mxu0 0.0
          %1135 = vmatprep.subr.mxu0 0.0
          %1136 = vmatpush2.xpose.msra.mxu0 0.0
          %1137 = vmatprep.subr.mxu0 0.0
          %1138 = vmatpush2.xpose.msra.mxu0 0.0
          %1139 = vmatprep.subr.mxu0 0.0
          %1140 = vmatpush2.xpose.msra.mxu0 0.0
          %1141 = vmatprep.subr.mxu0 0.0
          %1142 = vmatpush2.xpose.msra.mxu0 0.0
          %1143 = vmatprep.subr.mxu0 0.0
          %1144 = vmatpush2.xpose.msra.mxu0 0.0
          %1145 = vmatprep.subr.mxu0 0.0
          %1146 = vmatpush2.xpose.msra.mxu0 0.0
          %1147 = vmatprep.subr.mxu0 0.0
          %1148 = vmatpush2.xpose.msra.mxu0 0.0
          %1149 = vmatprep.subr.mxu0 0.0
          %1150 = vmatpush2.xpose.msra.mxu0 0.0
          %1151 = vmatprep.subr.mxu0 0.0
          %1152 = vmatpush2.xpose.msra.mxu0 0.0
          %1153 = vmatprep.mubr.f32.mxu0 0.0
          %1154 = vmatmul.mubr.f32.gmra.mxu0 %v1084
          %v1155 = vpop.f32.mrf.mxu0
          %v1156 = vadd.f32 0.0, %v1155
          %v1157 = vpop.f32.mrf.mxu0
          %1158 = vdwg.mxu0
          %v1160 = vsel %vm1006, %v1004, 0
          %v1163 = vsel %vm1006, %v852, 0
          %1165 = vmatprep.subr.mxu0 0.0
          %1166 = vmatpush1.xpose.msra.mxu0 0.0
          %1167 = vmatprep.subr.mxu0 0.0
          %1168 = vmatpush1.xpose.msra.mxu0 0.0
          %1169 = vmatprep.subr.mxu0 0.0
          %1170 = vmatpush1.xpose.msra.mxu0 0.0
          %1171 = vmatprep.subr.mxu0 0.0
          %1172 = vmatpush1.xpose.msra.mxu0 0.0
          %1173 = vmatprep.subr.mxu0 0.0
          %1174 = vmatpush1.xpose.msra.mxu0 0.0
          %1175 = vmatprep.subr.mxu0 0.0
          %1176 = vmatpush1.xpose.msra.mxu0 0.0
          %1177 = vmatprep.subr.mxu0 0.0
          %1178 = vmatpush1.xpose.msra.mxu0 0.0
          %1179 = vmatprep.subr.mxu0 0.0
          %1180 = vmatpush1.xpose.msra.mxu0 0.0
          %1181 = vmatprep.subr.mxu0 0.0
          %1182 = vmatpush1.xpose.msra.mxu0 0.0
          %1183 = vmatprep.subr.mxu0 0.0
          %1184 = vmatpush1.xpose.msra.mxu0 0.0
          %1185 = vmatprep.subr.mxu0 0.0
          %1186 = vmatpush1.xpose.msra.mxu0 0.0
          %1187 = vmatprep.subr.mxu0 0.0
          %1188 = vmatpush1.xpose.msra.mxu0 0.0
          %1189 = vmatprep.subr.mxu0 0.0
          %1190 = vmatpush1.xpose.msra.mxu0 0.0
          %1191 = vmatprep.subr.mxu0 0.0
          %1192 = vmatpush1.xpose.msra.mxu0 0.0
          %1193 = vmatprep.subr.mxu0 0.0
          %1194 = vmatpush1.xpose.msra.mxu0 0.0
          %1195 = vmatprep.subr.mxu0 0.0
          %1196 = vmatpush1.xpose.msra.mxu0 %v1163
          %1197 = vmatprep.subr.mxu0 0.0
          %1198 = vmatpush2.xpose.msra.mxu0 0.0
          %1199 = vmatprep.subr.mxu0 0.0
          %1200 = vmatpush2.xpose.msra.mxu0 0.0
          %1201 = vmatprep.subr.mxu0 0.0
          %1202 = vmatpush2.xpose.msra.mxu0 0.0
          %1203 = vmatprep.subr.mxu0 0.0
          %1204 = vmatpush2.xpose.msra.mxu0 0.0
          %1205 = vmatprep.subr.mxu0 0.0
          %1206 = vmatpush2.xpose.msra.mxu0 0.0
          %1207 = vmatprep.subr.mxu0 0.0
          %1208 = vmatpush2.xpose.msra.mxu0 0.0
          %1209 = vmatprep.subr.mxu0 0.0
          %1210 = vmatpush2.xpose.msra.mxu0 0.0
          %1211 = vmatprep.subr.mxu0 0.0
          %1212 = vmatpush2.xpose.msra.mxu0 0.0
          %1213 = vmatprep.subr.mxu0 0.0
          %1214 = vmatpush2.xpose.msra.mxu0 0.0
          %1215 = vmatprep.subr.mxu0 0.0
          %1216 = vmatpush2.xpose.msra.mxu0 0.0
          %1217 = vmatprep.subr.mxu0 0.0
          %1218 = vmatpush2.xpose.msra.mxu0 0.0
          %1219 = vmatprep.subr.mxu0 0.0
          %1220 = vmatpush2.xpose.msra.mxu0 0.0
          %1221 = vmatprep.subr.mxu0 0.0
          %1222 = vmatpush2.xpose.msra.mxu0 0.0
          %1223 = vmatprep.subr.mxu0 0.0
          %1224 = vmatpush2.xpose.msra.mxu0 0.0
          %1225 = vmatprep.subr.mxu0 0.0
          %1226 = vmatpush2.xpose.msra.mxu0 0.0
          %1227 = vmatprep.subr.mxu0 0.0
          %1228 = vmatpush2.xpose.msra.mxu0 0.0
          %1229 = vmatprep.mubr.f32.mxu0 0.0
          %1230 = vmatmul.mubr.f32.gmra.mxu0 %v1160
          %v1231 = vpop.f32.mrf.mxu0
          %v1232 = vadd.f32 0.0, %v1231
          %v1233 = vpop.f32.mrf.mxu0
          %1234 = vdwg.mxu0
          %v1236 = vsel %vm1006, %v1005, 0
          %v1239 = vsel %vm1006, %v853, 0
          %1241 = vmatprep.subr.mxu0 0.0
          %1242 = vmatpush1.xpose.msra.mxu0 0.0
          %1243 = vmatprep.subr.mxu0 0.0
          %1244 = vmatpush1.xpose.msra.mxu0 0.0
          %1245 = vmatprep.subr.mxu0 0.0
          %1246 = vmatpush1.xpose.msra.mxu0 0.0
          %1247 = vmatprep.subr.mxu0 0.0
          %1248 = vmatpush1.xpose.msra.mxu0 0.0
          %1249 = vmatprep.subr.mxu0 0.0
          %1250 = vmatpush1.xpose.msra.mxu0 0.0
          %1251 = vmatprep.subr.mxu0 0.0
          %1252 = vmatpush1.xpose.msra.mxu0 0.0
          %1253 = vmatprep.subr.mxu0 0.0
          %1254 = vmatpush1.xpose.msra.mxu0 0.0
          %1255 = vmatprep.subr.mxu0 0.0
          %1256 = vmatpush1.xpose.msra.mxu0 0.0
          %1257 = vmatprep.subr.mxu0 0.0
          %1258 = vmatpush1.xpose.msra.mxu0 0.0
          %1259 = vmatprep.subr.mxu0 0.0
          %1260 = vmatpush1.xpose.msra.mxu0 0.0
          %1261 = vmatprep.subr.mxu0 0.0
          %1262 = vmatpush1.xpose.msra.mxu0 0.0
          %1263 = vmatprep.subr.mxu0 0.0
          %1264 = vmatpush1.xpose.msra.mxu0 0.0
          %1265 = vmatprep.subr.mxu0 0.0
          %1266 = vmatpush1.xpose.msra.mxu0 0.0
          %1267 = vmatprep.subr.mxu0 0.0
          %1268 = vmatpush1.xpose.msra.mxu0 0.0
          %1269 = vmatprep.subr.mxu0 0.0
          %1270 = vmatpush1.xpose.msra.mxu0 0.0
          %1271 = vmatprep.subr.mxu0 0.0
          %1272 = vmatpush1.xpose.msra.mxu0 %v1239
          %1273 = vmatprep.subr.mxu0 0.0
          %1274 = vmatpush2.xpose.msra.mxu0 0.0
          %1275 = vmatprep.subr.mxu0 0.0
          %1276 = vmatpush2.xpose.msra.mxu0 0.0
          %1277 = vmatprep.subr.mxu0 0.0
          %1278 = vmatpush2.xpose.msra.mxu0 0.0
          %1279 = vmatprep.subr.mxu0 0.0
          %1280 = vmatpush2.xpose.msra.mxu0 0.0
          %1281 = vmatprep.subr.mxu0 0.0
          %1282 = vmatpush2.xpose.msra.mxu0 0.0
          %1283 = vmatprep.subr.mxu0 0.0
          %1284 = vmatpush2.xpose.msra.mxu0 0.0
          %1285 = vmatprep.subr.mxu0 0.0
          %1286 = vmatpush2.xpose.msra.mxu0 0.0
          %1287 = vmatprep.subr.mxu0 0.0
          %1288 = vmatpush2.xpose.msra.mxu0 0.0
          %1289 = vmatprep.subr.mxu0 0.0
          %1290 = vmatpush2.xpose.msra.mxu0 0.0
          %1291 = vmatprep.subr.mxu0 0.0
          %1292 = vmatpush2.xpose.msra.mxu0 0.0
          %1293 = vmatprep.subr.mxu0 0.0
          %1294 = vmatpush2.xpose.msra.mxu0 0.0
          %1295 = vmatprep.subr.mxu0 0.0
          %1296 = vmatpush2.xpose.msra.mxu0 0.0
          %1297 = vmatprep.subr.mxu0 0.0
          %1298 = vmatpush2.xpose.msra.mxu0 0.0
          %1299 = vmatprep.subr.mxu0 0.0
          %1300 = vmatpush2.xpose.msra.mxu0 0.0
          %1301 = vmatprep.subr.mxu0 0.0
          %1302 = vmatpush2.xpose.msra.mxu0 0.0
          %1303 = vmatprep.subr.mxu0 0.0
          %1304 = vmatpush2.xpose.msra.mxu0 0.0
          %1305 = vmatprep.mubr.f32.mxu0 0.0
          %1306 = vmatmul.mubr.f32.gmra.mxu0 %v1236
          %v1307 = vpop.f32.mrf.mxu0
          %v1308 = vadd.f32 0.0, %v1307
          %v1309 = vpop.f32.mrf.mxu0
          %1310 = vdwg.mxu0
          %v1311 = vlaneseq
          %v1312 = vshrl.u32 %v1311, 7
          %v1313 = vstv %s622
          %v1314 = vadd.s32 %v1313, %v1312
          %v1315 = vlaneseq
          %v1316 = vand.u32 %v1315, 127
          %v1317 = vstv %s623
          %v1318 = vadd.s32 %v1317, %v1316
          %vm1319 = vcmp.gt.s32.totalorder %v1318, %v1314
          %v1320 = vsel %vm1319, 1, 0
          %vm1321 = vcmp.eq.s32.totalorder %v1320, 1
          %v1322 = vsel %vm1321, -1e+30, %v1080
          %v1323 = vsel %vm1321, -1e+30, %v1156
          %v1324 = vsel %vm1321, -1e+30, %v1232
          %v1325 = vsel %vm1321, -1e+30, %v1308
          %v1326 = vld [vmem:[#allocation3] sm:$0xff]
          %v1327 = vld [vmem:[#allocation3 + $0x8] sm:$0xff]
          %v1328 = vld [vmem:[#allocation3 + $0x10] sm:$0xff]
          %v1329 = vld [vmem:[#allocation3 + $0x18] sm:$0xff]
          %v1330 = vsel %vm1006, %v1322, -inf
          %1331 = vmax.xlane.f32.xlu0 %v1330
          %v1332 = vpop.xlane.xlu0 %1331
          %v1333 = vsel %vm1006, %v1323, -inf
          %1334 = vmax.xlane.f32.xlu0 %v1333
          %v1335 = vpop.xlane.xlu0 %1334
          %v1336 = vsel %vm1006, %v1324, -inf
          %1337 = vmax.xlane.f32.xlu0 %v1336
          %v1338 = vpop.xlane.xlu0 %1337
          %v1339 = vsel %vm1006, %v1325, -inf
          %1340 = vmax.xlane.f32.xlu0 %v1339
          %v1341 = vpop.xlane.xlu0 %1340
          %v1342 = vmax.f32 %v1326, %v1332
          %v1343 = vmax.f32 %v1327, %v1335
          %v1344 = vmax.f32 %v1328, %v1338
          %v1345 = vmax.f32 %v1329, %v1341
          %v1346 = vsub.f32 %v1326, %v1342
          %v1347 = vsub.f32 %v1327, %v1343
          %v1348 = vsub.f32 %v1328, %v1344
          %v1349 = vsub.f32 %v1329, %v1345
          %v1350 = vmul.f32 %v1346, 1.442695
          %v1351 = vpow.pop %v1350
          %v1352 = vmul.f32 %v1347, 1.442695
          %v1353 = vpow.pop %v1352
          %v1354 = vmul.f32 %v1348, 1.442695
          %v1355 = vpow.pop %v1354
          %v1356 = vmul.f32 %v1349, 1.442695
          %v1357 = vpow.pop %v1356
          %1359 = vset.pattern.permute.xlu0 0
          %1360 = vperm.xlu0 %1359, %v1342
          %v1361 = vpop.permute.xlu0 %1360
          %1364 = vset.pattern.permute.xlu0 0
          %1365 = vperm.xlu0 %1364, %v1343
          %v1366 = vpop.permute.xlu0 %1365
          %1369 = vset.pattern.permute.xlu0 0
          %1370 = vperm.xlu0 %1369, %v1344
          %v1371 = vpop.permute.xlu0 %1370
          %1374 = vset.pattern.permute.xlu0 0
          %1375 = vperm.xlu0 %1374, %v1345
          %v1376 = vpop.permute.xlu0 %1375
          %v1378 = vsub.f32 %v1322, %v1361
          %v1379 = vsub.f32 %v1323, %v1366
          %v1380 = vsub.f32 %v1324, %v1371
          %v1381 = vsub.f32 %v1325, %v1376
          %v1382 = vmul.f32 %v1378, 1.442695
          %v1383 = vpow.pop %v1382
          %v1384 = vmul.f32 %v1379, 1.442695
          %v1385 = vpow.pop %v1384
          %v1386 = vmul.f32 %v1380, 1.442695
          %v1387 = vpow.pop %v1386
          %v1388 = vmul.f32 %v1381, 1.442695
          %v1389 = vpow.pop %v1388
          %v1390 = vld [vmem:[#allocation4] sm:$0xff]
          %v1391 = vld [vmem:[#allocation4 + $0x8] sm:$0xff]
          %v1392 = vld [vmem:[#allocation4 + $0x10] sm:$0xff]
          %v1393 = vld [vmem:[#allocation4 + $0x18] sm:$0xff]
          %v1394 = vmul.f32 %v1351, %v1390
          %v1395 = vmul.f32 %v1353, %v1391
          %v1396 = vmul.f32 %v1355, %v1392
          %v1397 = vmul.f32 %v1357, %v1393
          %v1398 = vsel %vm1006, %v1383, 0.0
          %1399 = vadd.xlane.f32.xlu0 %v1398
          %v1400 = vpop.xlane.xlu0 %1399
          %v1401 = vsel %vm1006, %v1385, 0.0
          %1402 = vadd.xlane.f32.xlu0 %v1401
          %v1403 = vpop.xlane.xlu0 %1402
          %v1404 = vsel %vm1006, %v1387, 0.0
          %1405 = vadd.xlane.f32.xlu0 %v1404
          %v1406 = vpop.xlane.xlu0 %1405
          %v1407 = vsel %vm1006, %v1389, 0.0
          %1408 = vadd.xlane.f32.xlu0 %v1407
          %v1409 = vpop.xlane.xlu0 %1408
          %v1410 = vadd.f32 %v1394, %v1400
          %v1411 = vadd.f32 %v1395, %v1403
          %v1412 = vadd.f32 %v1396, %v1406
          %v1413 = vadd.f32 %v1397, %v1409
          %vm1414 = vcmask 7168
          %1415 = vst.msk [vmem:[#allocation4] sm:$0xff] %vm1414, %v1410
          %1416 = vst.msk [vmem:[#allocation4 + $0x8] sm:$0xff] %vm1414, %v1411
          %1417 = vst.msk [vmem:[#allocation4 + $0x10] sm:$0xff] %vm1414, %v1412
          %1418 = vst.msk [vmem:[#allocation4 + $0x18] sm:$0xff] %vm1414, %v1413
          %v1419 = vld [vmem:[#allocation5] sm:$0xff]
          %v1420 = vld [vmem:[#allocation5 + $0x8] sm:$0xff]
          %v1421 = vld [vmem:[#allocation5 + $0x10] sm:$0xff]
          %v1422 = vld [vmem:[#allocation5 + $0x18] sm:$0xff]
          %1424 = vset.pattern.permute.xlu0 0
          %1425 = vperm.xlu0 %1424, %v1351
          %v1426 = vpop.permute.xlu0 %1425
          %1429 = vset.pattern.permute.xlu0 0
          %1430 = vperm.xlu0 %1429, %v1353
          %v1431 = vpop.permute.xlu0 %1430
          %1434 = vset.pattern.permute.xlu0 0
          %1435 = vperm.xlu0 %1434, %v1355
          %v1436 = vpop.permute.xlu0 %1435
          %1439 = vset.pattern.permute.xlu0 0
          %1440 = vperm.xlu0 %1439, %v1357
          %v1441 = vpop.permute.xlu0 %1440
          %v1443 = vmul.f32 %v1426, %v1419
          %v1444 = vmul.f32 %v1431, %v1420
          %v1445 = vmul.f32 %v1436, %v1421
          %v1446 = vmul.f32 %v1441, %v1422
          %v1448 = vsel %vm1006, %v1383, 0
          %1450 = vmatprep.subr.mxu0 0.0
          %1451 = vmatpush1.msra.mxu0 0.0
          %1452 = vmatprep.subr.mxu0 0.0
          %1453 = vmatpush1.msra.mxu0 0.0
          %1454 = vmatprep.subr.mxu0 0.0
          %1455 = vmatpush1.msra.mxu0 0.0
          %1456 = vmatprep.subr.mxu0 0.0
          %1457 = vmatpush1.msra.mxu0 0.0
          %1458 = vmatprep.subr.mxu0 0.0
          %1459 = vmatpush1.msra.mxu0 0.0
          %1460 = vmatprep.subr.mxu0 0.0
          %1461 = vmatpush1.msra.mxu0 0.0
          %1462 = vmatprep.subr.mxu0 0.0
          %1463 = vmatpush1.msra.mxu0 0.0
          %1464 = vmatprep.subr.mxu0 0.0
          %1465 = vmatpush1.msra.mxu0 0.0
          %1466 = vmatprep.subr.mxu0 0.0
          %1467 = vmatpush1.msra.mxu0 0.0
          %1468 = vmatprep.subr.mxu0 0.0
          %1469 = vmatpush1.msra.mxu0 0.0
          %1470 = vmatprep.subr.mxu0 0.0
          %1471 = vmatpush1.msra.mxu0 0.0
          %1472 = vmatprep.subr.mxu0 0.0
          %1473 = vmatpush1.msra.mxu0 0.0
          %1474 = vmatprep.subr.mxu0 0.0
          %1475 = vmatpush1.msra.mxu0 0.0
          %1476 = vmatprep.subr.mxu0 0.0
          %1477 = vmatpush1.msra.mxu0 0.0
          %1478 = vmatprep.subr.mxu0 0.0
          %1479 = vmatpush1.msra.mxu0 0.0
          %1480 = vmatprep.subr.mxu0 0.0
          %1481 = vmatpush1.msra.mxu0 %v998
          %1482 = vmatprep.subr.mxu0 0.0
          %1483 = vmatpush2.msra.mxu0 0.0
          %1484 = vmatprep.subr.mxu0 0.0
          %1485 = vmatpush2.msra.mxu0 0.0
          %1486 = vmatprep.subr.mxu0 0.0
          %1487 = vmatpush2.msra.mxu0 0.0
          %1488 = vmatprep.subr.mxu0 0.0
          %1489 = vmatpush2.msra.mxu0 0.0
          %1490 = vmatprep.subr.mxu0 0.0
          %1491 = vmatpush2.msra.mxu0 0.0
          %1492 = vmatprep.subr.mxu0 0.0
          %1493 = vmatpush2.msra.mxu0 0.0
          %1494 = vmatprep.subr.mxu0 0.0
          %1495 = vmatpush2.msra.mxu0 0.0
          %1496 = vmatprep.subr.mxu0 0.0
          %1497 = vmatpush2.msra.mxu0 0.0
          %1498 = vmatprep.subr.mxu0 0.0
          %1499 = vmatpush2.msra.mxu0 0.0
          %1500 = vmatprep.subr.mxu0 0.0
          %1501 = vmatpush2.msra.mxu0 0.0
          %1502 = vmatprep.subr.mxu0 0.0
          %1503 = vmatpush2.msra.mxu0 0.0
          %1504 = vmatprep.subr.mxu0 0.0
          %1505 = vmatpush2.msra.mxu0 0.0
          %1506 = vmatprep.subr.mxu0 0.0
          %1507 = vmatpush2.msra.mxu0 0.0
          %1508 = vmatprep.subr.mxu0 0.0
          %1509 = vmatpush2.msra.mxu0 0.0
          %1510 = vmatprep.subr.mxu0 0.0
          %1511 = vmatpush2.msra.mxu0 0.0
          %1512 = vmatprep.subr.mxu0 0.0
          %1513 = vmatpush2.msra.mxu0 0.0
          %1514 = vmatprep.mubr.f32.mxu0 0.0
          %1515 = vmatmul.mubr.f32.gmra.mxu0 %v1448
          %v1516 = vpop.f32.mrf.mxu0
          %v1517 = vadd.f32 0.0, %v1516
          %v1518 = vpop.f32.mrf.mxu0
          %1519 = vdwg.mxu0
          %v1521 = vsel %vm1006, %v1385, 0
          %1523 = vmatprep.subr.mxu0 0.0
          %1524 = vmatpush1.msra.mxu0 0.0
          %1525 = vmatprep.subr.mxu0 0.0
          %1526 = vmatpush1.msra.mxu0 0.0
          %1527 = vmatprep.subr.mxu0 0.0
          %1528 = vmatpush1.msra.mxu0 0.0
          %1529 = vmatprep.subr.mxu0 0.0
          %1530 = vmatpush1.msra.mxu0 0.0
          %1531 = vmatprep.subr.mxu0 0.0
          %1532 = vmatpush1.msra.mxu0 0.0
          %1533 = vmatprep.subr.mxu0 0.0
          %1534 = vmatpush1.msra.mxu0 0.0
          %1535 = vmatprep.subr.mxu0 0.0
          %1536 = vmatpush1.msra.mxu0 0.0
          %1537 = vmatprep.subr.mxu0 0.0
          %1538 = vmatpush1.msra.mxu0 0.0
          %1539 = vmatprep.subr.mxu0 0.0
          %1540 = vmatpush1.msra.mxu0 0.0
          %1541 = vmatprep.subr.mxu0 0.0
          %1542 = vmatpush1.msra.mxu0 0.0
          %1543 = vmatprep.subr.mxu0 0.0
          %1544 = vmatpush1.msra.mxu0 0.0
          %1545 = vmatprep.subr.mxu0 0.0
          %1546 = vmatpush1.msra.mxu0 0.0
          %1547 = vmatprep.subr.mxu0 0.0
          %1548 = vmatpush1.msra.mxu0 0.0
          %1549 = vmatprep.subr.mxu0 0.0
          %1550 = vmatpush1.msra.mxu0 0.0
          %1551 = vmatprep.subr.mxu0 0.0
          %1552 = vmatpush1.msra.mxu0 0.0
          %1553 = vmatprep.subr.mxu0 0.0
          %1554 = vmatpush1.msra.mxu0 %v999
          %1555 = vmatprep.subr.mxu0 0.0
          %1556 = vmatpush2.msra.mxu0 0.0
          %1557 = vmatprep.subr.mxu0 0.0
          %1558 = vmatpush2.msra.mxu0 0.0
          %1559 = vmatprep.subr.mxu0 0.0
          %1560 = vmatpush2.msra.mxu0 0.0
          %1561 = vmatprep.subr.mxu0 0.0
          %1562 = vmatpush2.msra.mxu0 0.0
          %1563 = vmatprep.subr.mxu0 0.0
          %1564 = vmatpush2.msra.mxu0 0.0
          %1565 = vmatprep.subr.mxu0 0.0
          %1566 = vmatpush2.msra.mxu0 0.0
          %1567 = vmatprep.subr.mxu0 0.0
          %1568 = vmatpush2.msra.mxu0 0.0
          %1569 = vmatprep.subr.mxu0 0.0
          %1570 = vmatpush2.msra.mxu0 0.0
          %1571 = vmatprep.subr.mxu0 0.0
          %1572 = vmatpush2.msra.mxu0 0.0
          %1573 = vmatprep.subr.mxu0 0.0
          %1574 = vmatpush2.msra.mxu0 0.0
          %1575 = vmatprep.subr.mxu0 0.0
          %1576 = vmatpush2.msra.mxu0 0.0
          %1577 = vmatprep.subr.mxu0 0.0
          %1578 = vmatpush2.msra.mxu0 0.0
          %1579 = vmatprep.subr.mxu0 0.0
          %1580 = vmatpush2.msra.mxu0 0.0
          %1581 = vmatprep.subr.mxu0 0.0
          %1582 = vmatpush2.msra.mxu0 0.0
          %1583 = vmatprep.subr.mxu0 0.0
          %1584 = vmatpush2.msra.mxu0 0.0
          %1585 = vmatprep.subr.mxu0 0.0
          %1586 = vmatpush2.msra.mxu0 0.0
          %1587 = vmatprep.mubr.f32.mxu0 0.0
          %1588 = vmatmul.mubr.f32.gmra.mxu0 %v1521
          %v1589 = vpop.f32.mrf.mxu0
          %v1590 = vadd.f32 0.0, %v1589
          %v1591 = vpop.f32.mrf.mxu0
          %1592 = vdwg.mxu0
          %v1594 = vsel %vm1006, %v1387, 0
          %1596 = vmatprep.subr.mxu0 0.0
          %1597 = vmatpush1.msra.mxu0 0.0
          %1598 = vmatprep.subr.mxu0 0.0
          %1599 = vmatpush1.msra.mxu0 0.0
          %1600 = vmatprep.subr.mxu0 0.0
          %1601 = vmatpush1.msra.mxu0 0.0
          %1602 = vmatprep.subr.mxu0 0.0
          %1603 = vmatpush1.msra.mxu0 0.0
          %1604 = vmatprep.subr.mxu0 0.0
          %1605 = vmatpush1.msra.mxu0 0.0
          %1606 = vmatprep.subr.mxu0 0.0
          %1607 = vmatpush1.msra.mxu0 0.0
          %1608 = vmatprep.subr.mxu0 0.0
          %1609 = vmatpush1.msra.mxu0 0.0
          %1610 = vmatprep.subr.mxu0 0.0
          %1611 = vmatpush1.msra.mxu0 0.0
          %1612 = vmatprep.subr.mxu0 0.0
          %1613 = vmatpush1.msra.mxu0 0.0
          %1614 = vmatprep.subr.mxu0 0.0
          %1615 = vmatpush1.msra.mxu0 0.0
          %1616 = vmatprep.subr.mxu0 0.0
          %1617 = vmatpush1.msra.mxu0 0.0
          %1618 = vmatprep.subr.mxu0 0.0
          %1619 = vmatpush1.msra.mxu0 0.0
          %1620 = vmatprep.subr.mxu0 0.0
          %1621 = vmatpush1.msra.mxu0 0.0
          %1622 = vmatprep.subr.mxu0 0.0
          %1623 = vmatpush1.msra.mxu0 0.0
          %1624 = vmatprep.subr.mxu0 0.0
          %1625 = vmatpush1.msra.mxu0 0.0
          %1626 = vmatprep.subr.mxu0 0.0
          %1627 = vmatpush1.msra.mxu0 %v1000
          %1628 = vmatprep.subr.mxu0 0.0
          %1629 = vmatpush2.msra.mxu0 0.0
          %1630 = vmatprep.subr.mxu0 0.0
          %1631 = vmatpush2.msra.mxu0 0.0
          %1632 = vmatprep.subr.mxu0 0.0
          %1633 = vmatpush2.msra.mxu0 0.0
          %1634 = vmatprep.subr.mxu0 0.0
          %1635 = vmatpush2.msra.mxu0 0.0
          %1636 = vmatprep.subr.mxu0 0.0
          %1637 = vmatpush2.msra.mxu0 0.0
          %1638 = vmatprep.subr.mxu0 0.0
          %1639 = vmatpush2.msra.mxu0 0.0
          %1640 = vmatprep.subr.mxu0 0.0
          %1641 = vmatpush2.msra.mxu0 0.0
          %1642 = vmatprep.subr.mxu0 0.0
          %1643 = vmatpush2.msra.mxu0 0.0
          %1644 = vmatprep.subr.mxu0 0.0
          %1645 = vmatpush2.msra.mxu0 0.0
          %1646 = vmatprep.subr.mxu0 0.0
          %1647 = vmatpush2.msra.mxu0 0.0
          %1648 = vmatprep.subr.mxu0 0.0
          %1649 = vmatpush2.msra.mxu0 0.0
          %1650 = vmatprep.subr.mxu0 0.0
          %1651 = vmatpush2.msra.mxu0 0.0
          %1652 = vmatprep.subr.mxu0 0.0
          %1653 = vmatpush2.msra.mxu0 0.0
          %1654 = vmatprep.subr.mxu0 0.0
          %1655 = vmatpush2.msra.mxu0 0.0
          %1656 = vmatprep.subr.mxu0 0.0
          %1657 = vmatpush2.msra.mxu0 0.0
          %1658 = vmatprep.subr.mxu0 0.0
          %1659 = vmatpush2.msra.mxu0 0.0
          %1660 = vmatprep.mubr.f32.mxu0 0.0
          %1661 = vmatmul.mubr.f32.gmra.mxu0 %v1594
          %v1662 = vpop.f32.mrf.mxu0
          %v1663 = vadd.f32 0.0, %v1662
          %v1664 = vpop.f32.mrf.mxu0
          %1665 = vdwg.mxu0
          %v1667 = vsel %vm1006, %v1389, 0
          %1669 = vmatprep.subr.mxu0 0.0
          %1670 = vmatpush1.msra.mxu0 0.0
          %1671 = vmatprep.subr.mxu0 0.0
          %1672 = vmatpush1.msra.mxu0 0.0
          %1673 = vmatprep.subr.mxu0 0.0
          %1674 = vmatpush1.msra.mxu0 0.0
          %1675 = vmatprep.subr.mxu0 0.0
          %1676 = vmatpush1.msra.mxu0 0.0
          %1677 = vmatprep.subr.mxu0 0.0
          %1678 = vmatpush1.msra.mxu0 0.0
          %1679 = vmatprep.subr.mxu0 0.0
          %1680 = vmatpush1.msra.mxu0 0.0
          %1681 = vmatprep.subr.mxu0 0.0
          %1682 = vmatpush1.msra.mxu0 0.0
          %1683 = vmatprep.subr.mxu0 0.0
          %1684 = vmatpush1.msra.mxu0 0.0
          %1685 = vmatprep.subr.mxu0 0.0
          %1686 = vmatpush1.msra.mxu0 0.0
          %1687 = vmatprep.subr.mxu0 0.0
          %1688 = vmatpush1.msra.mxu0 0.0
          %1689 = vmatprep.subr.mxu0 0.0
          %1690 = vmatpush1.msra.mxu0 0.0
          %1691 = vmatprep.subr.mxu0 0.0
          %1692 = vmatpush1.msra.mxu0 0.0
          %1693 = vmatprep.subr.mxu0 0.0
          %1694 = vmatpush1.msra.mxu0 0.0
          %1695 = vmatprep.subr.mxu0 0.0
          %1696 = vmatpush1.msra.mxu0 0.0
          %1697 = vmatprep.subr.mxu0 0.0
          %1698 = vmatpush1.msra.mxu0 0.0
          %1699 = vmatprep.subr.mxu0 0.0
          %1700 = vmatpush1.msra.mxu0 %v1001
          %1701 = vmatprep.subr.mxu0 0.0
          %1702 = vmatpush2.msra.mxu0 0.0
          %1703 = vmatprep.subr.mxu0 0.0
          %1704 = vmatpush2.msra.mxu0 0.0
          %1705 = vmatprep.subr.mxu0 0.0
          %1706 = vmatpush2.msra.mxu0 0.0
          %1707 = vmatprep.subr.mxu0 0.0
          %1708 = vmatpush2.msra.mxu0 0.0
          %1709 = vmatprep.subr.mxu0 0.0
          %1710 = vmatpush2.msra.mxu0 0.0
          %1711 = vmatprep.subr.mxu0 0.0
          %1712 = vmatpush2.msra.mxu0 0.0
          %1713 = vmatprep.subr.mxu0 0.0
          %1714 = vmatpush2.msra.mxu0 0.0
          %1715 = vmatprep.subr.mxu0 0.0
          %1716 = vmatpush2.msra.mxu0 0.0
          %1717 = vmatprep.subr.mxu0 0.0
          %1718 = vmatpush2.msra.mxu0 0.0
          %1719 = vmatprep.subr.mxu0 0.0
          %1720 = vmatpush2.msra.mxu0 0.0
          %1721 = vmatprep.subr.mxu0 0.0
          %1722 = vmatpush2.msra.mxu0 0.0
          %1723 = vmatprep.subr.mxu0 0.0
          %1724 = vmatpush2.msra.mxu0 0.0
          %1725 = vmatprep.subr.mxu0 0.0
          %1726 = vmatpush2.msra.mxu0 0.0
          %1727 = vmatprep.subr.mxu0 0.0
          %1728 = vmatpush2.msra.mxu0 0.0
          %1729 = vmatprep.subr.mxu0 0.0
          %1730 = vmatpush2.msra.mxu0 0.0
          %1731 = vmatprep.subr.mxu0 0.0
          %1732 = vmatpush2.msra.mxu0 0.0
          %1733 = vmatprep.mubr.f32.mxu0 0.0
          %1734 = vmatmul.mubr.f32.gmra.mxu0 %v1667
          %v1735 = vpop.f32.mrf.mxu0
          %v1736 = vadd.f32 0.0, %v1735
          %v1737 = vpop.f32.mrf.mxu0
          %1738 = vdwg.mxu0
          %v1739 = vadd.f32 %v1443, %v1517
          %v1740 = vadd.f32 %v1444, %v1590
          %v1741 = vadd.f32 %v1445, %v1663
          %v1742 = vadd.f32 %v1446, %v1736
          %1743 = vst.msk [vmem:[#allocation5] sm:$0xff] %vm1006, %v1739
          %1744 = vst.msk [vmem:[#allocation5 + $0x8] sm:$0xff] %vm1006, %v1740
          %1745 = vst.msk [vmem:[#allocation5 + $0x10] sm:$0xff] %vm1006, %v1741
          %1746 = vst.msk [vmem:[#allocation5 + $0x18] sm:$0xff] %vm1006, %v1742
          %1747 = vst.msk [vmem:[#allocation3] sm:$0xff] %vm1414, %v1342
          %1748 = vst.msk [vmem:[#allocation3 + $0x8] sm:$0xff] %vm1414, %v1343
          %1749 = vst.msk [vmem:[#allocation3 + $0x10] sm:$0xff] %vm1414, %v1344
          %1750 = vst.msk [vmem:[#allocation3 + $0x18] sm:$0xff] %vm1414, %v1345
        $region72: #{tpu_custom_call.1} parent=43 // pred_fallthru
          _
        // Predicated region
        $region73: #{tpu_custom_call.1} parent=43 // pred_check
          %p1751 = pneg %p374
        $region74: #{tpu_custom_call.1} parent=43 // pred_check_branch
          %1753 = sbr.rel (%p1751) target = $region76
        $region75: #{tpu_custom_call.1} parent=43 // pred_region
          %v1754 = vld [vmem:[#allocation5] sm:$0xff]
          %v1755 = vld [vmem:[#allocation5 + $0x8] sm:$0xff]
          %v1756 = vld [vmem:[#allocation5 + $0x10] sm:$0xff]
          %v1757 = vld [vmem:[#allocation5 + $0x18] sm:$0xff]
          %v1758 = vld [vmem:[#allocation4] sm:$0xff]
          %v1759 = vld [vmem:[#allocation4 + $0x8] sm:$0xff]
          %v1760 = vld [vmem:[#allocation4 + $0x10] sm:$0xff]
          %v1761 = vld [vmem:[#allocation4 + $0x18] sm:$0xff]
          %1763 = vset.pattern.permute.xlu0 0
          %1764 = vperm.xlu0 %1763, %v1758
          %v1765 = vpop.permute.xlu0 %1764
          %1768 = vset.pattern.permute.xlu0 0
          %1769 = vperm.xlu0 %1768, %v1759
          %v1770 = vpop.permute.xlu0 %1769
          %1773 = vset.pattern.permute.xlu0 0
          %1774 = vperm.xlu0 %1773, %v1760
          %v1775 = vpop.permute.xlu0 %1774
          %1778 = vset.pattern.permute.xlu0 0
          %1779 = vperm.xlu0 %1778, %v1761
          %v1780 = vpop.permute.xlu0 %1779
          %v1782 = vrcp.pop %v1765
          %v1783 = vmul.f32 %v1754, %v1782
          %v1784 = vrcp.pop %v1770
          %v1785 = vmul.f32 %v1755, %v1784
          %v1786 = vrcp.pop %v1775
          %v1787 = vmul.f32 %v1756, %v1786
          %v1788 = vrcp.pop %v1780
          %v1789 = vmul.f32 %v1757, %v1788
          %v1790 = vld [vmem:[#allocation14] sm:$0xff]
          %v1791 = vld [vmem:[#allocation14 + $0x8] sm:$0xff]
          %v1792 = vld [vmem:[#allocation14 + $0x10] sm:$0xff]
          %v1793 = vld [vmem:[#allocation14 + $0x18] sm:$0xff]
          %vm1794 = vcmask 64512
          %v1796 = vsel %vm1794, %v1783, 0
          %1798 = vmatprep.subr.mxu0 0.0
          %1799 = vmatpush1.msra.mxu0 0.0
          %1800 = vmatprep.subr.mxu0 0.0
          %1801 = vmatpush1.msra.mxu0 0.0
          %1802 = vmatprep.subr.mxu0 0.0
          %1803 = vmatpush1.msra.mxu0 0.0
          %1804 = vmatprep.subr.mxu0 0.0
          %1805 = vmatpush1.msra.mxu0 0.0
          %1806 = vmatprep.subr.mxu0 0.0
          %1807 = vmatpush1.msra.mxu0 0.0
          %1808 = vmatprep.subr.mxu0 0.0
          %1809 = vmatpush1.msra.mxu0 0.0
          %1810 = vmatprep.subr.mxu0 0.0
          %1811 = vmatpush1.msra.mxu0 0.0
          %1812 = vmatprep.subr.mxu0 0.0
          %1813 = vmatpush1.msra.mxu0 0.0
          %1814 = vmatprep.subr.mxu0 0.0
          %1815 = vmatpush1.msra.mxu0 0.0
          %1816 = vmatprep.subr.mxu0 0.0
          %1817 = vmatpush1.msra.mxu0 0.0
          %1818 = vmatprep.subr.mxu0 0.0
          %1819 = vmatpush1.msra.mxu0 0.0
          %1820 = vmatprep.subr.mxu0 0.0
          %1821 = vmatpush1.msra.mxu0 0.0
          %1822 = vmatprep.subr.mxu0 0.0
          %1823 = vmatpush1.msra.mxu0 0.0
          %1824 = vmatprep.subr.mxu0 0.0
          %1825 = vmatpush1.msra.mxu0 0.0
          %1826 = vmatprep.subr.mxu0 0.0
          %1827 = vmatpush1.msra.mxu0 0.0
          %1828 = vmatprep.subr.mxu0 0.0
          %1829 = vmatpush1.msra.mxu0 %v1790
          %1830 = vmatprep.subr.mxu0 0.0
          %1831 = vmatpush2.msra.mxu0 0.0
          %1832 = vmatprep.subr.mxu0 0.0
          %1833 = vmatpush2.msra.mxu0 0.0
          %1834 = vmatprep.subr.mxu0 0.0
          %1835 = vmatpush2.msra.mxu0 0.0
          %1836 = vmatprep.subr.mxu0 0.0
          %1837 = vmatpush2.msra.mxu0 0.0
          %1838 = vmatprep.subr.mxu0 0.0
          %1839 = vmatpush2.msra.mxu0 0.0
          %1840 = vmatprep.subr.mxu0 0.0
          %1841 = vmatpush2.msra.mxu0 0.0
          %1842 = vmatprep.subr.mxu0 0.0
          %1843 = vmatpush2.msra.mxu0 0.0
          %1844 = vmatprep.subr.mxu0 0.0
          %1845 = vmatpush2.msra.mxu0 0.0
          %1846 = vmatprep.subr.mxu0 0.0
          %1847 = vmatpush2.msra.mxu0 0.0
          %1848 = vmatprep.subr.mxu0 0.0
          %1849 = vmatpush2.msra.mxu0 0.0
          %1850 = vmatprep.subr.mxu0 0.0
          %1851 = vmatpush2.msra.mxu0 0.0
          %1852 = vmatprep.subr.mxu0 0.0
          %1853 = vmatpush2.msra.mxu0 0.0
          %1854 = vmatprep.subr.mxu0 0.0
          %1855 = vmatpush2.msra.mxu0 0.0
          %1856 = vmatprep.subr.mxu0 0.0
          %1857 = vmatpush2.msra.mxu0 0.0
          %1858 = vmatprep.subr.mxu0 0.0
          %1859 = vmatpush2.msra.mxu0 0.0
          %1860 = vmatprep.subr.mxu0 0.0
          %1861 = vmatpush2.msra.mxu0 0.0
          %1862 = vmatprep.mubr.f32.mxu0 0.0
          %1863 = vmatmul.mubr.f32.gmra.mxu0 %v1796
          %v1864 = vpop.f32.mrf.mxu0
          %v1865 = vadd.f32 0.0, %v1864
          %v1866 = vpop.f32.mrf.mxu0
          %1867 = vdwg.mxu0
          %v1869 = vsel %vm1794, %v1785, 0
          %1871 = vmatprep.subr.mxu0 0.0
          %1872 = vmatpush1.msra.mxu0 0.0
          %1873 = vmatprep.subr.mxu0 0.0
          %1874 = vmatpush1.msra.mxu0 0.0
          %1875 = vmatprep.subr.mxu0 0.0
          %1876 = vmatpush1.msra.mxu0 0.0
          %1877 = vmatprep.subr.mxu0 0.0
          %1878 = vmatpush1.msra.mxu0 0.0
          %1879 = vmatprep.subr.mxu0 0.0
          %1880 = vmatpush1.msra.mxu0 0.0
          %1881 = vmatprep.subr.mxu0 0.0
          %1882 = vmatpush1.msra.mxu0 0.0
          %1883 = vmatprep.subr.mxu0 0.0
          %1884 = vmatpush1.msra.mxu0 0.0
          %1885 = vmatprep.subr.mxu0 0.0
          %1886 = vmatpush1.msra.mxu0 0.0
          %1887 = vmatprep.subr.mxu0 0.0
          %1888 = vmatpush1.msra.mxu0 0.0
          %1889 = vmatprep.subr.mxu0 0.0
          %1890 = vmatpush1.msra.mxu0 0.0
          %1891 = vmatprep.subr.mxu0 0.0
          %1892 = vmatpush1.msra.mxu0 0.0
          %1893 = vmatprep.subr.mxu0 0.0
          %1894 = vmatpush1.msra.mxu0 0.0
          %1895 = vmatprep.subr.mxu0 0.0
          %1896 = vmatpush1.msra.mxu0 0.0
          %1897 = vmatprep.subr.mxu0 0.0
          %1898 = vmatpush1.msra.mxu0 0.0
          %1899 = vmatprep.subr.mxu0 0.0
          %1900 = vmatpush1.msra.mxu0 0.0
          %1901 = vmatprep.subr.mxu0 0.0
          %1902 = vmatpush1.msra.mxu0 %v1791
          %1903 = vmatprep.subr.mxu0 0.0
          %1904 = vmatpush2.msra.mxu0 0.0
          %1905 = vmatprep.subr.mxu0 0.0
          %1906 = vmatpush2.msra.mxu0 0.0
          %1907 = vmatprep.subr.mxu0 0.0
          %1908 = vmatpush2.msra.mxu0 0.0
          %1909 = vmatprep.subr.mxu0 0.0
          %1910 = vmatpush2.msra.mxu0 0.0
          %1911 = vmatprep.subr.mxu0 0.0
          %1912 = vmatpush2.msra.mxu0 0.0
          %1913 = vmatprep.subr.mxu0 0.0
          %1914 = vmatpush2.msra.mxu0 0.0
          %1915 = vmatprep.subr.mxu0 0.0
          %1916 = vmatpush2.msra.mxu0 0.0
          %1917 = vmatprep.subr.mxu0 0.0
          %1918 = vmatpush2.msra.mxu0 0.0
          %1919 = vmatprep.subr.mxu0 0.0
          %1920 = vmatpush2.msra.mxu0 0.0
          %1921 = vmatprep.subr.mxu0 0.0
          %1922 = vmatpush2.msra.mxu0 0.0
          %1923 = vmatprep.subr.mxu0 0.0
          %1924 = vmatpush2.msra.mxu0 0.0
          %1925 = vmatprep.subr.mxu0 0.0
          %1926 = vmatpush2.msra.mxu0 0.0
          %1927 = vmatprep.subr.mxu0 0.0
          %1928 = vmatpush2.msra.mxu0 0.0
          %1929 = vmatprep.subr.mxu0 0.0
          %1930 = vmatpush2.msra.mxu0 0.0
          %1931 = vmatprep.subr.mxu0 0.0
          %1932 = vmatpush2.msra.mxu0 0.0
          %1933 = vmatprep.subr.mxu0 0.0
          %1934 = vmatpush2.msra.mxu0 0.0
          %1935 = vmatprep.mubr.f32.mxu0 0.0
          %1936 = vmatmul.mubr.f32.gmra.mxu0 %v1869
          %v1937 = vpop.f32.mrf.mxu0
          %v1938 = vadd.f32 0.0, %v1937
          %v1939 = vpop.f32.mrf.mxu0
          %1940 = vdwg.mxu0
          %v1942 = vsel %vm1794, %v1787, 0
          %1944 = vmatprep.subr.mxu0 0.0
          %1945 = vmatpush1.msra.mxu0 0.0
          %1946 = vmatprep.subr.mxu0 0.0
          %1947 = vmatpush1.msra.mxu0 0.0
          %1948 = vmatprep.subr.mxu0 0.0
          %1949 = vmatpush1.msra.mxu0 0.0
          %1950 = vmatprep.subr.mxu0 0.0
          %1951 = vmatpush1.msra.mxu0 0.0
          %1952 = vmatprep.subr.mxu0 0.0
          %1953 = vmatpush1.msra.mxu0 0.0
          %1954 = vmatprep.subr.mxu0 0.0
          %1955 = vmatpush1.msra.mxu0 0.0
          %1956 = vmatprep.subr.mxu0 0.0
          %1957 = vmatpush1.msra.mxu0 0.0
          %1958 = vmatprep.subr.mxu0 0.0
          %1959 = vmatpush1.msra.mxu0 0.0
          %1960 = vmatprep.subr.mxu0 0.0
          %1961 = vmatpush1.msra.mxu0 0.0
          %1962 = vmatprep.subr.mxu0 0.0
          %1963 = vmatpush1.msra.mxu0 0.0
          %1964 = vmatprep.subr.mxu0 0.0
          %1965 = vmatpush1.msra.mxu0 0.0
          %1966 = vmatprep.subr.mxu0 0.0
          %1967 = vmatpush1.msra.mxu0 0.0
          %1968 = vmatprep.subr.mxu0 0.0
          %1969 = vmatpush1.msra.mxu0 0.0
          %1970 = vmatprep.subr.mxu0 0.0
          %1971 = vmatpush1.msra.mxu0 0.0
          %1972 = vmatprep.subr.mxu0 0.0
          %1973 = vmatpush1.msra.mxu0 0.0
          %1974 = vmatprep.subr.mxu0 0.0
          %1975 = vmatpush1.msra.mxu0 %v1792
          %1976 = vmatprep.subr.mxu0 0.0
          %1977 = vmatpush2.msra.mxu0 0.0
          %1978 = vmatprep.subr.mxu0 0.0
          %1979 = vmatpush2.msra.mxu0 0.0
          %1980 = vmatprep.subr.mxu0 0.0
          %1981 = vmatpush2.msra.mxu0 0.0
          %1982 = vmatprep.subr.mxu0 0.0
          %1983 = vmatpush2.msra.mxu0 0.0
          %1984 = vmatprep.subr.mxu0 0.0
          %1985 = vmatpush2.msra.mxu0 0.0
          %1986 = vmatprep.subr.mxu0 0.0
          %1987 = vmatpush2.msra.mxu0 0.0
          %1988 = vmatprep.subr.mxu0 0.0
          %1989 = vmatpush2.msra.mxu0 0.0
          %1990 = vmatprep.subr.mxu0 0.0
          %1991 = vmatpush2.msra.mxu0 0.0
          %1992 = vmatprep.subr.mxu0 0.0
          %1993 = vmatpush2.msra.mxu0 0.0
          %1994 = vmatprep.subr.mxu0 0.0
          %1995 = vmatpush2.msra.mxu0 0.0
          %1996 = vmatprep.subr.mxu0 0.0
          %1997 = vmatpush2.msra.mxu0 0.0
          %1998 = vmatprep.subr.mxu0 0.0
          %1999 = vmatpush2.msra.mxu0 0.0
          %2000 = vmatprep.subr.mxu0 0.0
          %2001 = vmatpush2.msra.mxu0 0.0
          %2002 = vmatprep.subr.mxu0 0.0
          %2003 = vmatpush2.msra.mxu0 0.0
          %2004 = vmatprep.subr.mxu0 0.0
          %2005 = vmatpush2.msra.mxu0 0.0
          %2006 = vmatprep.subr.mxu0 0.0
          %2007 = vmatpush2.msra.mxu0 0.0
          %2008 = vmatprep.mubr.f32.mxu0 0.0
          %2009 = vmatmul.mubr.f32.gmra.mxu0 %v1942
          %v2010 = vpop.f32.mrf.mxu0
          %v2011 = vadd.f32 0.0, %v2010
          %v2012 = vpop.f32.mrf.mxu0
          %2013 = vdwg.mxu0
          %v2015 = vsel %vm1794, %v1789, 0
          %2017 = vmatprep.subr.mxu0 0.0
          %2018 = vmatpush1.msra.mxu0 0.0
          %2019 = vmatprep.subr.mxu0 0.0
          %2020 = vmatpush1.msra.mxu0 0.0
          %2021 = vmatprep.subr.mxu0 0.0
          %2022 = vmatpush1.msra.mxu0 0.0
          %2023 = vmatprep.subr.mxu0 0.0
          %2024 = vmatpush1.msra.mxu0 0.0
          %2025 = vmatprep.subr.mxu0 0.0
          %2026 = vmatpush1.msra.mxu0 0.0
          %2027 = vmatprep.subr.mxu0 0.0
          %2028 = vmatpush1.msra.mxu0 0.0
          %2029 = vmatprep.subr.mxu0 0.0
          %2030 = vmatpush1.msra.mxu0 0.0
          %2031 = vmatprep.subr.mxu0 0.0
          %2032 = vmatpush1.msra.mxu0 0.0
          %2033 = vmatprep.subr.mxu0 0.0
          %2034 = vmatpush1.msra.mxu0 0.0
          %2035 = vmatprep.subr.mxu0 0.0
          %2036 = vmatpush1.msra.mxu0 0.0
          %2037 = vmatprep.subr.mxu0 0.0
          %2038 = vmatpush1.msra.mxu0 0.0
          %2039 = vmatprep.subr.mxu0 0.0
          %2040 = vmatpush1.msra.mxu0 0.0
          %2041 = vmatprep.subr.mxu0 0.0
          %2042 = vmatpush1.msra.mxu0 0.0
          %2043 = vmatprep.subr.mxu0 0.0
          %2044 = vmatpush1.msra.mxu0 0.0
          %2045 = vmatprep.subr.mxu0 0.0
          %2046 = vmatpush1.msra.mxu0 0.0
          %2047 = vmatprep.subr.mxu0 0.0
          %2048 = vmatpush1.msra.mxu0 %v1793
          %2049 = vmatprep.subr.mxu0 0.0
          %2050 = vmatpush2.msra.mxu0 0.0
          %2051 = vmatprep.subr.mxu0 0.0
          %2052 = vmatpush2.msra.mxu0 0.0
          %2053 = vmatprep.subr.mxu0 0.0
          %2054 = vmatpush2.msra.mxu0 0.0
          %2055 = vmatprep.subr.mxu0 0.0
          %2056 = vmatpush2.msra.mxu0 0.0
          %2057 = vmatprep.subr.mxu0 0.0
          %2058 = vmatpush2.msra.mxu0 0.0
          %2059 = vmatprep.subr.mxu0 0.0
          %2060 = vmatpush2.msra.mxu0 0.0
          %2061 = vmatprep.subr.mxu0 0.0
          %2062 = vmatpush2.msra.mxu0 0.0
          %2063 = vmatprep.subr.mxu0 0.0
          %2064 = vmatpush2.msra.mxu0 0.0
          %2065 = vmatprep.subr.mxu0 0.0
          %2066 = vmatpush2.msra.mxu0 0.0
          %2067 = vmatprep.subr.mxu0 0.0
          %2068 = vmatpush2.msra.mxu0 0.0
          %2069 = vmatprep.subr.mxu0 0.0
          %2070 = vmatpush2.msra.mxu0 0.0
          %2071 = vmatprep.subr.mxu0 0.0
          %2072 = vmatpush2.msra.mxu0 0.0
          %2073 = vmatprep.subr.mxu0 0.0
          %2074 = vmatpush2.msra.mxu0 0.0
          %2075 = vmatprep.subr.mxu0 0.0
          %2076 = vmatpush2.msra.mxu0 0.0
          %2077 = vmatprep.subr.mxu0 0.0
          %2078 = vmatpush2.msra.mxu0 0.0
          %2079 = vmatprep.subr.mxu0 0.0
          %2080 = vmatpush2.msra.mxu0 0.0
          %2081 = vmatprep.mubr.f32.mxu0 0.0
          %2082 = vmatmul.mubr.f32.gmra.mxu0 %v2015
          %v2083 = vpop.f32.mrf.mxu0
          %v2084 = vadd.f32 0.0, %v2083
          %v2085 = vpop.f32.mrf.mxu0
          %2086 = vdwg.mxu0
          %vm2087 = vcmask 261120
          %v2088 = vsel %vm2087, %v1865, 0.0
          %v2089 = vsel %vm2087, %v1938, 0.0
          %v2090 = vadd.f32 %v2088, %v2089
          %v2091 = vsel %vm2087, %v2011, 0.0
          %v2092 = vadd.f32 %v2090, %v2091
          %v2093 = vsel %vm2087, %v2084, 0.0
          %v2094 = vadd.f32 %v2092, %v2093
          %v2095 = vld [vmem:[%s5] sm:$0x1]
          %v2097 = vlaneseq
          %v2098 = vshrl.u32 %v2097, 7
          %v2099 = vsub.s32 0, %v2098
          %v2100 = vrot.slane %v2095, %v2099
          %v2102 = vadd.f32 %v2094, %v2100
          %2103 = vst.msk [vmem:[%s373] sm:$0xff] %vm2087, %v2102
        $region76: #{tpu_custom_call.1} parent=43 // pred_fallthru
          _
        %s2104 = sand.u32 %s196, 1
        %s2105 = scalar_lea.sflag [#allocation8], %s2104
        %s2106 = sand.u32 %s196, 1
        %s2107 = smul.addr %s2106, 8
        %s2108 = scalar_lea.vmem [#allocation15], %s2107
        // Predicated region
        $region77: #{tpu_custom_call.1} parent=43 // pred_check
          %p2109 = pneg %p206
        $region78: #{tpu_custom_call.1} parent=43 // pred_check_branch
          %2111 = sbr.rel (%p2109) target = $region80
        $region79: #{tpu_custom_call.1} parent=43 // pred_region
          %s2113 = ssub.s32 128, 128
          %2114 = vsyncadd %s2105, %s2113
          %s2115 = sadd.s32 %s33, %s32
          %s2116 = smul.addr %s2115, 128
          %s2117 = scalar_lea.hbm %s6, %s2116
          %s2119 = sshll.u32 %s2108, 4
          %s2120 = int_to_ptr.vmem [resolvable:$true] %s2119
          %2122 = dma.vmem_to_hbm [thread:$0]  %s2120, 128, %s2117, %s2105
        $region80: #{tpu_custom_call.1} parent=43 // pred_fallthru
          _
      $region44: #{tpu_custom_call.1} parent=5 // pred_fallthru
        _
      %p2123 = scmp.le.s32.totalorder 2, %s22
      // Predicated region
      $region81: #{tpu_custom_call.1} parent=5 // pred_check
        %p2124 = pneg %p2123
      $region82: #{tpu_custom_call.1} parent=5 // pred_check_branch
        %2126 = sbr.rel (%p2124) target = $region84
      $region83: #{tpu_custom_call.1} parent=5 // pred_region
        %s2127 = ssub.s32 %s22, 2
        // Predicated region
        $region85: #{tpu_custom_call.1} parent=83 // pred_check
          %p2128 = pneg %p212
        $region86: #{tpu_custom_call.1} parent=83 // pred_check_branch
          %2130 = sbr.rel (%p2128) target = $region88
        $region87: #{tpu_custom_call.1} parent=83 // pred_region
          %s2131 = sand.u32 %s197, 1
          %s2132 = scalar_lea.sflag [#allocation8], %s2131
          %s2133 = sand.u32 %s197, 1
          %s2134 = smul.addr %s2133, 8
          %s2135 = scalar_lea.vmem [#allocation15], %s2134
          %2136 = dma.done %s2132, 128
        $region88: #{tpu_custom_call.1} parent=83 // pred_fallthru
          _
      $region84: #{tpu_custom_call.1} parent=5 // pred_fallthru
        _
    $region6: #{tpu_custom_call.1} parent=1 // loop_footer
      %s26 = sadd.s32 1, %s22
    $region7: #{tpu_custom_call.1} parent=1 // loop_footer_branch
      %21 = sbr.rel target = $region3
    $region8: #{tpu_custom_call.1} parent=1 // loop_exit
      _
    %2137 = vsyncpa [#allocation7], 1
    %s2138 = scalar_lea.sflag [#allocation7], 1
    %2139 = vsyncpa %s2138, 1
    %2140 = vsyncpa [#allocation10], 1
    %s2141 = scalar_lea.sflag [#allocation10], 1
    %2142 = vsyncpa %s2141, 1
    %2143 = vsyncpa [#allocation13], 1
    %2144 = vsyncpa [#allocation8], 1
    %s2145 = scalar_lea.sflag [#allocation8], 1
    %2146 = vsyncpa %s2145, 1

</llo_original>
